<compile_context>
chip_gen: v7x
topology: tpu7x:2x2x1
jax: 0.10.0
libtpu: 0.0.40
codegen_flags: <defaults>
</compile_context>

<pallas_src>
import functools

import jax
import jax.numpy as jnp
from jax import lax
from jax.experimental import pallas as pl
from jax.experimental.pallas import tpu as pltpu


# ---------------------------------------------------------------------------
# Fused kernel: one grid step = one batch element.
# ---------------------------------------------------------------------------
def _fused_attn_kernel(x_ref, src_ref,
                       wq_ref, wk_ref, wv_ref, wo_ref,
                       bq_ref, bk_ref, bv_ref, bo_ref,
                       o_ref, *, num_heads, scale):
    # Contract last dim of lhs with last dim of rhs (== lhs @ rhs.T, no transpose emitted).
    dn = (((1,), (1,)), ((), ()))

    x = x_ref[0].astype(jnp.float32)        # (N, D)
    src = src_ref[0].astype(jnp.float32)    # (N, D)

    # nn.Linear: y = x @ W^T + b, W stored (out, in) -> contract both last dims.
    q = lax.dot_general(x, wq_ref[...], dn, preferred_element_type=jnp.float32) + bq_ref[...]
    k = lax.dot_general(src, wk_ref[...], dn, preferred_element_type=jnp.float32) + bk_ref[...]
    v = lax.dot_general(src, wv_ref[...], dn, preferred_element_type=jnp.float32) + bv_ref[...]

    n = x.shape[0]
    d_out = o_ref.shape[-1]
    hd = q.shape[-1] // num_heads
    wo = wo_ref[...]                        # (D_out, D_in)

    acc = jnp.zeros((n, d_out), jnp.float32)

    # Static, unrolled loop over heads; all slices are static (no dynamic relayout).
    for h in range(num_heads):
        lo = h * hd
        qh = q[:, lo:lo + hd]               # (N, hd)
        kh = k[:, lo:lo + hd]
        vh = v[:, lo:lo + hd]

        # scores = qh @ kh^T / sqrt(hd)
        s = lax.dot_general(qh, kh, dn, preferred_element_type=jnp.float32) * scale  # (N, N)
        s = s - jnp.max(s, axis=-1, keepdims=True)
        p = jnp.exp(s)
        p = p * pl.reciprocal(jnp.sum(p, axis=-1, keepdims=True), approx=True)

        oh = jnp.dot(p, vh, preferred_element_type=jnp.float32)                      # (N, hd)

        # Fold head-merge + output projection: oh @ W_o[:, lo:lo+hd]^T, summed over heads.
        acc = acc + lax.dot_general(oh, wo[:, lo:lo + hd], dn,
                                    preferred_element_type=jnp.float32)

    o_ref[0] = (acc + bo_ref[...]).astype(o_ref.dtype)


# ---------------------------------------------------------------------------
# Wrapper
# ---------------------------------------------------------------------------
def linear_attention_forward(params, x, source, num_heads):
    b, n, dim = x.shape
    head_dim = dim // num_heads
    scale = 1.0 / (head_dim ** 0.5)   # matches / head_dim ** self.scale with self.scale == 0.5

    kern = functools.partial(_fused_attn_kernel, num_heads=num_heads, scale=scale)

    tok_spec = pl.BlockSpec((1, n, dim), lambda bi: (bi, 0, 0))
    w_spec = pl.BlockSpec((dim, dim), lambda bi: (0, 0))
    b_spec = pl.BlockSpec((1, dim), lambda bi: (0, 0))

    return pl.pallas_call(
        kern,
        out_shape=jax.ShapeDtypeStruct((b, n, dim), x.dtype),
        grid=(b,),
        in_specs=[tok_spec, tok_spec,
                  w_spec, w_spec, w_spec, w_spec,
                  b_spec, b_spec, b_spec, b_spec],
        out_specs=tok_spec,
        compiler_params=pltpu.CompilerParams(
            dimension_semantics=("parallel",),          # shards batch over 2 TCs on v7x
            vmem_limit_bytes=32 * 1024 * 1024),
    )(x, source,
      params["wq"], params["wk"], params["wv"], params["wo"],
      params["bq"].reshape(1, dim), params["bk"].reshape(1, dim),
      params["bv"].reshape(1, dim), params["bo"].reshape(1, dim))


def init_params(key, dim):
    ks = jax.random.split(key, 8)
    bound = 1.0 / (dim ** 0.5)

    def w(k):   # nn.Linear-style (out, in) weight
        return jax.random.uniform(k, (dim, dim), jnp.float32, -bound, bound)

    def bvec(k):
        return jax.random.uniform(k, (dim,), jnp.float32, -bound, bound)

    return {
        "wq": w(ks[0]), "bq": bvec(ks[1]),
        "wk": w(ks[2]), "bk": bvec(ks[3]),
        "wv": w(ks[4]), "bv": bvec(ks[5]),
        "wo": w(ks[6]), "bo": bvec(ks[7]),
    }


if __name__ == "__main__":
    key = jax.random.PRNGKey(0)
    k_param, k_x, k_src = jax.random.split(key, 3)

    B, N, DIM, NUM_HEADS = 2, 16, 32, 4

    params = init_params(k_param, DIM)
    x = jax.random.normal(k_x, (B, N, DIM), jnp.float32)
    source = jax.random.normal(k_src, (B, N, DIM), jnp.float32)

    out = linear_attention_forward(params, x, source, NUM_HEADS)
    out = jax.block_until_ready(out)

    # Pure-JAX reference of the same math (exact softmax normalization).
    def ref(params, x, source):
        hd = DIM // NUM_HEADS
        q = x @ params["wq"].T + params["bq"]
        k = source @ params["wk"].T + params["bk"]
        v = source @ params["wv"].T + params["bv"]
        q = q.reshape(B, N, NUM_HEADS, hd).transpose(0, 2, 1, 3)
        k = k.reshape(B, N, NUM_HEADS, hd).transpose(0, 2, 1, 3)
        v = v.reshape(B, N, NUM_HEADS, hd).transpose(0, 2, 1, 3)
        s = jnp.einsum("bhqd,bhkd->bhqk", q, k) / (hd ** 0.5)
        p = jax.nn.softmax(s, axis=-1)
        a = jnp.einsum("bhqk,bhkd->bhqd", p, v)
        a = a.transpose(0, 2, 1, 3).reshape(B, N, DIM)
        return a @ params["wo"].T + params["bo"]

    r = ref(params, x, source)
    # Tolerance slightly looser than 1e-4 because the softmax denominator uses the
    # approximate EUP reciprocal (pl.reciprocal(approx=True)).
    assert jnp.allclose(out, r, atol=5e-3, rtol=5e-3), float(jnp.max(jnp.abs(out - r)))

    print("KERNEL_OK")
</pallas_src>

<mosaic_0001>
module attributes {stable_mosaic.version = 11 : i64} {
  func.func @_fused_attn_kernel(%arg0: i32, %arg1: memref<1x16x32xf32, #tpu.memory_space<vmem>>, %arg2: memref<1x16x32xf32, #tpu.memory_space<vmem>>, %arg3: memref<32x32xf32, #tpu.memory_space<vmem>>, %arg4: memref<32x32xf32, #tpu.memory_space<vmem>>, %arg5: memref<32x32xf32, #tpu.memory_space<vmem>>, %arg6: memref<32x32xf32, #tpu.memory_space<vmem>>, %arg7: memref<1x32xf32, #tpu.memory_space<vmem>>, %arg8: memref<1x32xf32, #tpu.memory_space<vmem>>, %arg9: memref<1x32xf32, #tpu.memory_space<vmem>>, %arg10: memref<1x32xf32, #tpu.memory_space<vmem>>, %arg11: memref<1x16x32xf32, #tpu.memory_space<vmem>>) attributes {dimension_semantics = [#tpu.dimension_semantics<parallel>], iteration_bounds = array<i64: 2>, scalar_prefetch = 0 : i64, scratch_operands = 0 : i64, tpu.core_type = #tpu.core_type<tc>, window_params = [{transform_indices = @transform_0, window_bounds = array<i64: 1, 16, 32>}, {transform_indices = @transform_1, window_bounds = array<i64: 1, 16, 32>}, {pipeline_mode = #tpu.pipeline_mode<synchronous>, transform_indices = @transform_2, window_bounds = array<i64: 32, 32>}, {pipeline_mode = #tpu.pipeline_mode<synchronous>, transform_indices = @transform_3, window_bounds = array<i64: 32, 32>}, {pipeline_mode = #tpu.pipeline_mode<synchronous>, transform_indices = @transform_4, window_bounds = array<i64: 32, 32>}, {pipeline_mode = #tpu.pipeline_mode<synchronous>, transform_indices = @transform_5, window_bounds = array<i64: 32, 32>}, {pipeline_mode = #tpu.pipeline_mode<synchronous>, transform_indices = @transform_6, window_bounds = array<i64: 1, 32>}, {pipeline_mode = #tpu.pipeline_mode<synchronous>, transform_indices = @transform_7, window_bounds = array<i64: 1, 32>}, {pipeline_mode = #tpu.pipeline_mode<synchronous>, transform_indices = @transform_8, window_bounds = array<i64: 1, 32>}, {pipeline_mode = #tpu.pipeline_mode<synchronous>, transform_indices = @transform_9, window_bounds = array<i64: 1, 32>}, {transform_indices = @transform_10, window_bounds = array<i64: 1, 16, 32>}]} {
    %c0 = arith.constant 0 : index
    %c0_0 = arith.constant 0 : index
    %c0_1 = arith.constant 0 : index
    %0 = vector.load %arg1[%c0, %c0_0, %c0_1] : memref<1x16x32xf32, #tpu.memory_space<vmem>>, vector<1x16x32xf32>
    %1 = vector.shape_cast %0 : vector<1x16x32xf32> to vector<16x32xf32>
    %c0_2 = arith.constant 0 : index
    %c0_3 = arith.constant 0 : index
    %c0_4 = arith.constant 0 : index
    %2 = vector.load %arg2[%c0_2, %c0_3, %c0_4] : memref<1x16x32xf32, #tpu.memory_space<vmem>>, vector<1x16x32xf32>
    %3 = vector.shape_cast %2 : vector<1x16x32xf32> to vector<16x32xf32>
    %c0_5 = arith.constant 0 : index
    %c0_6 = arith.constant 0 : index
    %4 = vector.load %arg3[%c0_5, %c0_6] : memref<32x32xf32, #tpu.memory_space<vmem>>, vector<32x32xf32>
    %cst = arith.constant dense<0.000000e+00> : vector<16x32xf32>
    %5 = tpu.matmul %1, %4, %cst {dimension_numbers = #tpu.dot_dimension_numbers<[1], [1], [0], [0], [0, 0, 1, 0], [], []>} : vector<16x32xf32>, vector<32x32xf32>, vector<16x32xf32> -> vector<16x32xf32>
    %c0_7 = arith.constant 0 : index
    %c0_8 = arith.constant 0 : index
    %6 = vector.load %arg7[%c0_7, %c0_8] : memref<1x32xf32, #tpu.memory_space<vmem>>, vector<1x32xf32>
    %7 = vector.broadcast %6 : vector<1x32xf32> to vector<16x32xf32>
    %8 = arith.addf %5, %7 : vector<16x32xf32>
    %c0_9 = arith.constant 0 : index
    %c0_10 = arith.constant 0 : index
    %9 = vector.load %arg4[%c0_9, %c0_10] : memref<32x32xf32, #tpu.memory_space<vmem>>, vector<32x32xf32>
    %cst_11 = arith.constant dense<0.000000e+00> : vector<16x32xf32>
    %10 = tpu.matmul %3, %9, %cst_11 {dimension_numbers = #tpu.dot_dimension_numbers<[1], [1], [0], [0], [0, 0, 1, 0], [], []>} : vector<16x32xf32>, vector<32x32xf32>, vector<16x32xf32> -> vector<16x32xf32>
    %c0_12 = arith.constant 0 : index
    %c0_13 = arith.constant 0 : index
    %11 = vector.load %arg8[%c0_12, %c0_13] : memref<1x32xf32, #tpu.memory_space<vmem>>, vector<1x32xf32>
    %12 = vector.broadcast %11 : vector<1x32xf32> to vector<16x32xf32>
    %13 = arith.addf %10, %12 : vector<16x32xf32>
    %c0_14 = arith.constant 0 : index
    %c0_15 = arith.constant 0 : index
    %14 = vector.load %arg5[%c0_14, %c0_15] : memref<32x32xf32, #tpu.memory_space<vmem>>, vector<32x32xf32>
    %cst_16 = arith.constant dense<0.000000e+00> : vector<16x32xf32>
    %15 = tpu.matmul %3, %14, %cst_16 {dimension_numbers = #tpu.dot_dimension_numbers<[1], [1], [0], [0], [0, 0, 1, 0], [], []>} : vector<16x32xf32>, vector<32x32xf32>, vector<16x32xf32> -> vector<16x32xf32>
    %c0_17 = arith.constant 0 : index
    %c0_18 = arith.constant 0 : index
    %16 = vector.load %arg9[%c0_17, %c0_18] : memref<1x32xf32, #tpu.memory_space<vmem>>, vector<1x32xf32>
    %17 = vector.broadcast %16 : vector<1x32xf32> to vector<16x32xf32>
    %18 = arith.addf %15, %17 : vector<16x32xf32>
    %c0_19 = arith.constant 0 : index
    %c0_20 = arith.constant 0 : index
    %19 = vector.load %arg6[%c0_19, %c0_20] : memref<32x32xf32, #tpu.memory_space<vmem>>, vector<32x32xf32>
    %cst_21 = arith.constant 0.000000e+00 : f32
    %20 = vector.broadcast %cst_21 : f32 to vector<16x32xf32>
    %21 = vector.extract_strided_slice %8 {offsets = [0, 0], sizes = [16, 8], strides = [1, 1]} : vector<16x32xf32> to vector<16x8xf32>
    %22 = vector.extract_strided_slice %13 {offsets = [0, 0], sizes = [16, 8], strides = [1, 1]} : vector<16x32xf32> to vector<16x8xf32>
    %23 = vector.extract_strided_slice %18 {offsets = [0, 0], sizes = [16, 8], strides = [1, 1]} : vector<16x32xf32> to vector<16x8xf32>
    %cst_22 = arith.constant dense<0.000000e+00> : vector<16x16xf32>
    %24 = tpu.matmul %21, %22, %cst_22 {dimension_numbers = #tpu.dot_dimension_numbers<[1], [1], [0], [0], [0, 0, 1, 0], [], []>} : vector<16x8xf32>, vector<16x8xf32>, vector<16x16xf32> -> vector<16x16xf32>
    %cst_23 = arith.constant 0.353553385 : f32
    %25 = vector.broadcast %cst_23 : f32 to vector<16x16xf32>
    %26 = arith.mulf %24, %25 : vector<16x16xf32>
    %cst_24 = arith.constant dense<0xFF800000> : vector<16xf32>
    %27 = vector.multi_reduction <maximumf>, %26, %cst_24 [1] : vector<16x16xf32> to vector<16xf32>
    %28 = vector.shape_cast %27 : vector<16xf32> to vector<16x1xf32>
    %29 = vector.broadcast %28 : vector<16x1xf32> to vector<16x16xf32>
    %30 = arith.subf %26, %29 : vector<16x16xf32>
    %31 = math.exp %30 : vector<16x16xf32>
    %cst_25 = arith.constant dense<0.000000e+00> : vector<16xf32>
    %32 = vector.multi_reduction <add>, %31, %cst_25 [1] : vector<16x16xf32> to vector<16xf32>
    %33 = vector.shape_cast %32 : vector<16xf32> to vector<16x1xf32>
    %34 = tpu.reciprocal %33 {approx = true} : vector<16x1xf32> -> vector<16x1xf32>
    %35 = vector.broadcast %34 : vector<16x1xf32> to vector<16x16xf32>
    %36 = arith.mulf %31, %35 : vector<16x16xf32>
    %cst_26 = arith.constant dense<0.000000e+00> : vector<16x8xf32>
    %37 = tpu.matmul %36, %23, %cst_26 {dimension_numbers = #tpu.dot_dimension_numbers<[1], [0], [0], [1], [0, 0, 1, 1], [], []>} : vector<16x16xf32>, vector<16x8xf32>, vector<16x8xf32> -> vector<16x8xf32>
    %38 = vector.extract_strided_slice %19 {offsets = [0, 0], sizes = [32, 8], strides = [1, 1]} : vector<32x32xf32> to vector<32x8xf32>
    %cst_27 = arith.constant dense<0.000000e+00> : vector<16x32xf32>
    %39 = tpu.matmul %37, %38, %cst_27 {dimension_numbers = #tpu.dot_dimension_numbers<[1], [1], [0], [0], [0, 0, 1, 0], [], []>} : vector<16x8xf32>, vector<32x8xf32>, vector<16x32xf32> -> vector<16x32xf32>
    %40 = arith.addf %20, %39 : vector<16x32xf32>
    %41 = vector.extract_strided_slice %8 {offsets = [0, 8], sizes = [16, 8], strides = [1, 1]} : vector<16x32xf32> to vector<16x8xf32>
    %42 = vector.extract_strided_slice %13 {offsets = [0, 8], sizes = [16, 8], strides = [1, 1]} : vector<16x32xf32> to vector<16x8xf32>
    %43 = vector.extract_strided_slice %18 {offsets = [0, 8], sizes = [16, 8], strides = [1, 1]} : vector<16x32xf32> to vector<16x8xf32>
    %cst_28 = arith.constant dense<0.000000e+00> : vector<16x16xf32>
    %44 = tpu.matmul %41, %42, %cst_28 {dimension_numbers = #tpu.dot_dimension_numbers<[1], [1], [0], [0], [0, 0, 1, 0], [], []>} : vector<16x8xf32>, vector<16x8xf32>, vector<16x16xf32> -> vector<16x16xf32>
    %cst_29 = arith.constant 0.353553385 : f32
    %45 = vector.broadcast %cst_29 : f32 to vector<16x16xf32>
    %46 = arith.mulf %44, %45 : vector<16x16xf32>
    %cst_30 = arith.constant dense<0xFF800000> : vector<16xf32>
    %47 = vector.multi_reduction <maximumf>, %46, %cst_30 [1] : vector<16x16xf32> to vector<16xf32>
    %48 = vector.shape_cast %47 : vector<16xf32> to vector<16x1xf32>
    %49 = vector.broadcast %48 : vector<16x1xf32> to vector<16x16xf32>
    %50 = arith.subf %46, %49 : vector<16x16xf32>
    %51 = math.exp %50 : vector<16x16xf32>
    %cst_31 = arith.constant dense<0.000000e+00> : vector<16xf32>
    %52 = vector.multi_reduction <add>, %51, %cst_31 [1] : vector<16x16xf32> to vector<16xf32>
    %53 = vector.shape_cast %52 : vector<16xf32> to vector<16x1xf32>
    %54 = tpu.reciprocal %53 {approx = true} : vector<16x1xf32> -> vector<16x1xf32>
    %55 = vector.broadcast %54 : vector<16x1xf32> to vector<16x16xf32>
    %56 = arith.mulf %51, %55 : vector<16x16xf32>
    %cst_32 = arith.constant dense<0.000000e+00> : vector<16x8xf32>
    %57 = tpu.matmul %56, %43, %cst_32 {dimension_numbers = #tpu.dot_dimension_numbers<[1], [0], [0], [1], [0, 0, 1, 1], [], []>} : vector<16x16xf32>, vector<16x8xf32>, vector<16x8xf32> -> vector<16x8xf32>
    %58 = vector.extract_strided_slice %19 {offsets = [0, 8], sizes = [32, 8], strides = [1, 1]} : vector<32x32xf32> to vector<32x8xf32>
    %cst_33 = arith.constant dense<0.000000e+00> : vector<16x32xf32>
    %59 = tpu.matmul %57, %58, %cst_33 {dimension_numbers = #tpu.dot_dimension_numbers<[1], [1], [0], [0], [0, 0, 1, 0], [], []>} : vector<16x8xf32>, vector<32x8xf32>, vector<16x32xf32> -> vector<16x32xf32>
    %60 = arith.addf %40, %59 : vector<16x32xf32>
    %61 = vector.extract_strided_slice %8 {offsets = [0, 16], sizes = [16, 8], strides = [1, 1]} : vector<16x32xf32> to vector<16x8xf32>
    %62 = vector.extract_strided_slice %13 {offsets = [0, 16], sizes = [16, 8], strides = [1, 1]} : vector<16x32xf32> to vector<16x8xf32>
    %63 = vector.extract_strided_slice %18 {offsets = [0, 16], sizes = [16, 8], strides = [1, 1]} : vector<16x32xf32> to vector<16x8xf32>
    %cst_34 = arith.constant dense<0.000000e+00> : vector<16x16xf32>
    %64 = tpu.matmul %61, %62, %cst_34 {dimension_numbers = #tpu.dot_dimension_numbers<[1], [1], [0], [0], [0, 0, 1, 0], [], []>} : vector<16x8xf32>, vector<16x8xf32>, vector<16x16xf32> -> vector<16x16xf32>
    %cst_35 = arith.constant 0.353553385 : f32
    %65 = vector.broadcast %cst_35 : f32 to vector<16x16xf32>
    %66 = arith.mulf %64, %65 : vector<16x16xf32>
    %cst_36 = arith.constant dense<0xFF800000> : vector<16xf32>
    %67 = vector.multi_reduction <maximumf>, %66, %cst_36 [1] : vector<16x16xf32> to vector<16xf32>
    %68 = vector.shape_cast %67 : vector<16xf32> to vector<16x1xf32>
    %69 = vector.broadcast %68 : vector<16x1xf32> to vector<16x16xf32>
    %70 = arith.subf %66, %69 : vector<16x16xf32>
    %71 = math.exp %70 : vector<16x16xf32>
    %cst_37 = arith.constant dense<0.000000e+00> : vector<16xf32>
    %72 = vector.multi_reduction <add>, %71, %cst_37 [1] : vector<16x16xf32> to vector<16xf32>
    %73 = vector.shape_cast %72 : vector<16xf32> to vector<16x1xf32>
    %74 = tpu.reciprocal %73 {approx = true} : vector<16x1xf32> -> vector<16x1xf32>
    %75 = vector.broadcast %74 : vector<16x1xf32> to vector<16x16xf32>
    %76 = arith.mulf %71, %75 : vector<16x16xf32>
    %cst_38 = arith.constant dense<0.000000e+00> : vector<16x8xf32>
    %77 = tpu.matmul %76, %63, %cst_38 {dimension_numbers = #tpu.dot_dimension_numbers<[1], [0], [0], [1], [0, 0, 1, 1], [], []>} : vector<16x16xf32>, vector<16x8xf32>, vector<16x8xf32> -> vector<16x8xf32>
    %78 = vector.extract_strided_slice %19 {offsets = [0, 16], sizes = [32, 8], strides = [1, 1]} : vector<32x32xf32> to vector<32x8xf32>
    %cst_39 = arith.constant dense<0.000000e+00> : vector<16x32xf32>
    %79 = tpu.matmul %77, %78, %cst_39 {dimension_numbers = #tpu.dot_dimension_numbers<[1], [1], [0], [0], [0, 0, 1, 0], [], []>} : vector<16x8xf32>, vector<32x8xf32>, vector<16x32xf32> -> vector<16x32xf32>
    %80 = arith.addf %60, %79 : vector<16x32xf32>
    %81 = vector.extract_strided_slice %8 {offsets = [0, 24], sizes = [16, 8], strides = [1, 1]} : vector<16x32xf32> to vector<16x8xf32>
    %82 = vector.extract_strided_slice %13 {offsets = [0, 24], sizes = [16, 8], strides = [1, 1]} : vector<16x32xf32> to vector<16x8xf32>
    %83 = vector.extract_strided_slice %18 {offsets = [0, 24], sizes = [16, 8], strides = [1, 1]} : vector<16x32xf32> to vector<16x8xf32>
    %cst_40 = arith.constant dense<0.000000e+00> : vector<16x16xf32>
    %84 = tpu.matmul %81, %82, %cst_40 {dimension_numbers = #tpu.dot_dimension_numbers<[1], [1], [0], [0], [0, 0, 1, 0], [], []>} : vector<16x8xf32>, vector<16x8xf32>, vector<16x16xf32> -> vector<16x16xf32>
    %cst_41 = arith.constant 0.353553385 : f32
    %85 = vector.broadcast %cst_41 : f32 to vector<16x16xf32>
    %86 = arith.mulf %84, %85 : vector<16x16xf32>
    %cst_42 = arith.constant dense<0xFF800000> : vector<16xf32>
    %87 = vector.multi_reduction <maximumf>, %86, %cst_42 [1] : vector<16x16xf32> to vector<16xf32>
    %88 = vector.shape_cast %87 : vector<16xf32> to vector<16x1xf32>
    %89 = vector.broadcast %88 : vector<16x1xf32> to vector<16x16xf32>
    %90 = arith.subf %86, %89 : vector<16x16xf32>
    %91 = math.exp %90 : vector<16x16xf32>
    %cst_43 = arith.constant dense<0.000000e+00> : vector<16xf32>
    %92 = vector.multi_reduction <add>, %91, %cst_43 [1] : vector<16x16xf32> to vector<16xf32>
    %93 = vector.shape_cast %92 : vector<16xf32> to vector<16x1xf32>
    %94 = tpu.reciprocal %93 {approx = true} : vector<16x1xf32> -> vector<16x1xf32>
    %95 = vector.broadcast %94 : vector<16x1xf32> to vector<16x16xf32>
    %96 = arith.mulf %91, %95 : vector<16x16xf32>
    %cst_44 = arith.constant dense<0.000000e+00> : vector<16x8xf32>
    %97 = tpu.matmul %96, %83, %cst_44 {dimension_numbers = #tpu.dot_dimension_numbers<[1], [0], [0], [1], [0, 0, 1, 1], [], []>} : vector<16x16xf32>, vector<16x8xf32>, vector<16x8xf32> -> vector<16x8xf32>
    %98 = vector.extract_strided_slice %19 {offsets = [0, 24], sizes = [32, 8], strides = [1, 1]} : vector<32x32xf32> to vector<32x8xf32>
    %cst_45 = arith.constant dense<0.000000e+00> : vector<16x32xf32>
    %99 = tpu.matmul %97, %98, %cst_45 {dimension_numbers = #tpu.dot_dimension_numbers<[1], [1], [0], [0], [0, 0, 1, 0], [], []>} : vector<16x8xf32>, vector<32x8xf32>, vector<16x32xf32> -> vector<16x32xf32>
    %100 = arith.addf %80, %99 : vector<16x32xf32>
    %c0_46 = arith.constant 0 : index
    %c0_47 = arith.constant 0 : index
    %101 = vector.load %arg10[%c0_46, %c0_47] : memref<1x32xf32, #tpu.memory_space<vmem>>, vector<1x32xf32>
    %102 = vector.broadcast %101 : vector<1x32xf32> to vector<16x32xf32>
    %103 = arith.addf %100, %102 : vector<16x32xf32>
    %c0_48 = arith.constant 0 : index
    %c0_49 = arith.constant 0 : index
    %c0_50 = arith.constant 0 : index
    %104 = vector.load %arg11[%c0_48, %c0_49, %c0_50] : memref<1x16x32xf32, #tpu.memory_space<vmem>>, vector<1x16x32xf32>
    %105 = vector.shape_cast %104 : vector<1x16x32xf32> to vector<16x32xf32>
    %106 = vector.shape_cast %103 : vector<16x32xf32> to vector<1x16x32xf32>
    tpu.vector_store %arg11[%c0_48, %c0_49, %c0_50], %106 {strides = array<i32>} : memref<1x16x32xf32, #tpu.memory_space<vmem>>, vector<1x16x32xf32>,
    return
  }
  func.func @transform_0(%arg0: i32) -> (i32, i32, i32) {
    %c0_i32 = arith.constant 0 : i32
    %c0_i32_0 = arith.constant 0 : i32
    %c0_i32_1 = arith.constant 0 : i32
    return %arg0, %c0_i32, %c0_i32_0 : i32, i32, i32
  }
  func.func @transform_1(%arg0: i32) -> (i32, i32, i32) {
    %c0_i32 = arith.constant 0 : i32
    %c0_i32_0 = arith.constant 0 : i32
    %c0_i32_1 = arith.constant 0 : i32
    return %arg0, %c0_i32, %c0_i32_0 : i32, i32, i32
  }
  func.func @transform_2(%arg0: i32) -> (i32, i32) {
    %c0_i32 = arith.constant 0 : i32
    %c0_i32_0 = arith.constant 0 : i32
    %c0_i32_1 = arith.constant 0 : i32
    return %c0_i32, %c0_i32_0 : i32, i32
  }
  func.func @transform_3(%arg0: i32) -> (i32, i32) {
    %c0_i32 = arith.constant 0 : i32
    %c0_i32_0 = arith.constant 0 : i32
    %c0_i32_1 = arith.constant 0 : i32
    return %c0_i32, %c0_i32_0 : i32, i32
  }
  func.func @transform_4(%arg0: i32) -> (i32, i32) {
    %c0_i32 = arith.constant 0 : i32
    %c0_i32_0 = arith.constant 0 : i32
    %c0_i32_1 = arith.constant 0 : i32
    return %c0_i32, %c0_i32_0 : i32, i32
  }
  func.func @transform_5(%arg0: i32) -> (i32, i32) {
    %c0_i32 = arith.constant 0 : i32
    %c0_i32_0 = arith.constant 0 : i32
    %c0_i32_1 = arith.constant 0 : i32
    return %c0_i32, %c0_i32_0 : i32, i32
  }
  func.func @transform_6(%arg0: i32) -> (i32, i32) {
    %c0_i32 = arith.constant 0 : i32
    %c0_i32_0 = arith.constant 0 : i32
    %c0_i32_1 = arith.constant 0 : i32
    return %c0_i32, %c0_i32_0 : i32, i32
  }
  func.func @transform_7(%arg0: i32) -> (i32, i32) {
    %c0_i32 = arith.constant 0 : i32
    %c0_i32_0 = arith.constant 0 : i32
    %c0_i32_1 = arith.constant 0 : i32
    return %c0_i32, %c0_i32_0 : i32, i32
  }
  func.func @transform_8(%arg0: i32) -> (i32, i32) {
    %c0_i32 = arith.constant 0 : i32
    %c0_i32_0 = arith.constant 0 : i32
    %c0_i32_1 = arith.constant 0 : i32
    return %c0_i32, %c0_i32_0 : i32, i32
  }
  func.func @transform_9(%arg0: i32) -> (i32, i32) {
    %c0_i32 = arith.constant 0 : i32
    %c0_i32_0 = arith.constant 0 : i32
    %c0_i32_1 = arith.constant 0 : i32
    return %c0_i32, %c0_i32_0 : i32, i32
  }
  func.func @transform_10(%arg0: i32) -> (i32, i32, i32) {
    %c0_i32 = arith.constant 0 : i32
    %c0_i32_0 = arith.constant 0 : i32
    %c0_i32_1 = arith.constant 0 : i32
    return %arg0, %c0_i32, %c0_i32_0 : i32, i32, i32
  }
}

</mosaic_0001>

<llo_original>
// kernel: tpu_custom_call.1
$region0: #{tpu_custom_call.1}
  #allocation0 [shape = 'u32[]', space=smem, size = 0x4, offset = 0x4, fixed_abs, tag = 'smem constant byte address 0x4 - core index']
  #allocation1 [shape = 'u32[144,128]{1,0:T(1,128)}', space=vmem, size = 0x12000, scoped, tag = 'internal scratch']
  %s0 = inlined_call_operand.hbm [shape: f32[2,16,32], index: 0, kind: input, shape index: {}]
  %s1 = inlined_call_operand.hbm [shape: f32[2,16,32], index: 1, kind: input, shape index: {}]
  %s2 = inlined_call_operand.hbm [shape: f32[32,32], index: 2, kind: input, shape index: {}]
  %s3 = inlined_call_operand.hbm [shape: f32[32,32], index: 3, kind: input, shape index: {}]
  %s4 = inlined_call_operand.hbm [shape: f32[32,32], index: 4, kind: input, shape index: {}]
  %s5 = inlined_call_operand.hbm [shape: f32[32,32], index: 5, kind: input, shape index: {}]
  %s6 = inlined_call_operand.vmem [shape: f32[1,32], index: 6, kind: input, shape index: {}]
  %s7 = inlined_call_operand.vmem [shape: f32[1,32], index: 7, kind: input, shape index: {}]
  %s8 = inlined_call_operand.vmem [shape: f32[1,32], index: 8, kind: input, shape index: {}]
  %s9 = inlined_call_operand.vmem [shape: f32[1,32], index: 9, kind: input, shape index: {}]
  %s10 = inlined_call_operand.hbm [shape: f32[2,16,32], index: 10, kind: output, shape index: {}]
  %s11 = sld [smem:[#allocation0]]
  $region97: #{tpu_custom_call.1} parent=0
    _
  %s13 = ssub.s32 1, %s11
  %s14 = scalar_select 0, %s13, %s11
  $region1: #{tpu_custom_call.1} parent=0
    #allocation2 [shape = 'u8[16384]{0}', space=vmem, size = 0x4000, scoped, tag = 'input window, operand 0']
    #allocation3 [shape = 's32[2]{0}', space=sflag, size = 0x8, scoped, tag = 'scoped memory for tpu_custom_call.1']
    #allocation4 [shape = 's32[2]{0}', space=sflag, size = 0x8, scoped, tag = 'scoped memory for tpu_custom_call.1']
    #allocation5 [shape = 'u8[16384]{0}', space=vmem, size = 0x4000, scoped, tag = 'input window, operand 1']
    #allocation6 [shape = 's32[2]{0}', space=sflag, size = 0x8, scoped, tag = 'scoped memory for tpu_custom_call.1']
    #allocation7 [shape = 'u8[16384]{0}', space=vmem, size = 0x4000, scoped, tag = 'input window, operand 2, single buffered']
    #allocation8 [shape = 'u8[16384]{0}', space=vmem, size = 0x4000, scoped, tag = 'input window, operand 3, single buffered']
    #allocation9 [shape = 's32[1]{0}', space=sflag, size = 0x4, scoped, tag = 'scoped memory for tpu_custom_call.1']
    #allocation10 [shape = 'u8[16384]{0}', space=vmem, size = 0x4000, scoped, tag = 'input window, operand 4, single buffered']
    #allocation11 [shape = 'u8[16384]{0}', space=vmem, size = 0x4000, scoped, tag = 'input window, operand 5, single buffered']
    #allocation12 [shape = 's32[1]{0}', space=sflag, size = 0x4, scoped, tag = 'scoped memory for tpu_custom_call.1']
    #allocation13 [shape = 'u8[16384]{0}', space=vmem, size = 0x4000, scoped, tag = 'output window, operand 0']
    %15 = vsyncpa [#allocation3], 0
    %s16 = scalar_lea.sflag [#allocation3], 1
    %17 = vsyncpa %s16, 0
    %18 = vsyncpa [#allocation6], 0
    %s19 = scalar_lea.sflag [#allocation6], 1
    %20 = vsyncpa %s19, 0
    %21 = vsyncpa [#allocation9], 0
    %22 = vsyncpa [#allocation12], 0
    %23 = vsyncpa [#allocation4], 0
    %s24 = scalar_lea.sflag [#allocation4], 1
    %25 = vsyncpa %s24, 0
    loop: start=0, step=1, limit=4
    $region2: #{tpu_custom_call.1} parent=1 // loop_pre_header
      _
    $region3: #{tpu_custom_call.1} parent=1 // loop_header
      %s27 = sphi 0, %s31
      %p28 = scmp.ge.s32.totalorder %s27, 4
      %s37 = sphi 0, %s39
      %s40 = sphi 0, %s37
      %s41 = sphi 0, %s40
      %s57 = sphi 0, %s41
      %s63 = sphi 0, %s65
      %s66 = sphi 0, %s63
      %s67 = sphi 0, %s66
      %s83 = sphi 0, %s67
      %s87 = sphi 0, %s87
      %s89 = sphi 0, %s87
      %s90 = sphi 0, %s89
      %s104 = sphi 0, %s90
      %s108 = sphi 0, %s108
      %s110 = sphi 0, %s108
      %s111 = sphi 0, %s110
      %s125 = sphi 0, %s111
      %s129 = sphi 0, %s129
      %s131 = sphi 0, %s129
      %s132 = sphi 0, %s131
      %s146 = sphi 0, %s132
      %s150 = sphi 0, %s150
      %s152 = sphi 0, %s150
      %s153 = sphi 0, %s152
      %s167 = sphi 0, %s153
      %s171 = sphi 0, %s171
      %s173 = sphi 0, %s171
      %s174 = sphi 0, %s173
      %s188 = sphi 0, %s174
      %s192 = sphi 0, %s192
      %s194 = sphi 0, %s192
      %s195 = sphi 0, %s194
      %s209 = sphi 0, %s195
      %s213 = sphi 0, %s213
      %s215 = sphi 0, %s213
      %s216 = sphi 0, %s215
      %s230 = sphi 0, %s216
      %s234 = sphi 0, %s234
      %s236 = sphi 0, %s234
      %s237 = sphi 0, %s236
      %s251 = sphi 0, %s237
      %s257 = sphi 0, %s259
      %s260 = sphi 0, %s257
      %s261 = sphi 0, %s260
      %s277 = sphi 0, %s261
    $region4: #{tpu_custom_call.1} parent=1 // loop_header_branch
      %30 = sbr.rel (%p28) target = $region8
    $region5: #{tpu_custom_call.1} parent=1 // loop_body
      %s32 = ssub.s32 %s27, 1
      %s33 = ssub.s32 %s27, 2
      %s34 = sadd.s32 %s27, 1
      %s35 = ssub.s32 %s27, %s34
      %p36 = scmp.eq.s32.totalorder %s35, 0
      %s38 = sadd.s32 %s37, 1
      %s39 = scalar_select %p36, %s37, %s38
      %p42 = pneg %p36
      %p43 = scmp.eq.s32.totalorder %s27, 1
      %p44 = por %p42, %p43
      %p45 = scmp.ne.s32.totalorder %s37, %s40
      %p46 = scmp.eq.s32.totalorder %s27, 0
      %p47 = por %p45, %p46
      %p48 = scmp.ne.s32.totalorder %s37, %s40
      %p49 = scmp.eq.s32.totalorder %s32, 1
      %p50 = por %p48, %p49
      %p51 = scmp.ne.s32.totalorder %s40, %s41
      %p52 = scmp.eq.s32.totalorder %s32, 0
      %p53 = por %p51, %p52
      %p54 = scmp.ne.s32.totalorder %s40, %s41
      %p55 = scmp.eq.s32.totalorder %s33, 1
      %p56 = por %p54, %p55
      %p58 = scmp.ne.s32.totalorder %s41, %s57
      %p59 = scmp.eq.s32.totalorder %s33, 0
      %p60 = por %p58, %p59
      %s61 = ssub.s32 %s27, %s34
      %p62 = scmp.eq.s32.totalorder %s61, 0
      %s64 = sadd.s32 %s63, 1
      %s65 = scalar_select %p62, %s63, %s64
      %p68 = pneg %p62
      %p69 = scmp.eq.s32.totalorder %s27, 1
      %p70 = por %p68, %p69
      %p71 = scmp.ne.s32.totalorder %s63, %s66
      %p72 = scmp.eq.s32.totalorder %s27, 0
      %p73 = por %p71, %p72
      %p74 = scmp.ne.s32.totalorder %s63, %s66
      %p75 = scmp.eq.s32.totalorder %s32, 1
      %p76 = por %p74, %p75
      %p77 = scmp.ne.s32.totalorder %s66, %s67
      %p78 = scmp.eq.s32.totalorder %s32, 0
      %p79 = por %p77, %p78
      %p80 = scmp.ne.s32.totalorder %s66, %s67
      %p81 = scmp.eq.s32.totalorder %s33, 1
      %p82 = por %p80, %p81
      %p84 = scmp.ne.s32.totalorder %s67, %s83
      %p85 = scmp.eq.s32.totalorder %s33, 0
      %p86 = por %p84, %p85
      %s88 = sadd.s32 %s87, 1
      %p91 = scmp.eq.s32.totalorder %s27, 1
      %p92 = scmp.ne.s32.totalorder %s87, %s89
      %p93 = scmp.eq.s32.totalorder %s27, 0
      %p94 = por %p92, %p93
      %p95 = scmp.ne.s32.totalorder %s87, %s89
      %p96 = scmp.eq.s32.totalorder %s32, 1
      %p97 = por %p95, %p96
      %p98 = scmp.ne.s32.totalorder %s89, %s90
      %p99 = scmp.eq.s32.totalorder %s32, 0
      %p100 = por %p98, %p99
      %p101 = scmp.ne.s32.totalorder %s89, %s90
      %p102 = scmp.eq.s32.totalorder %s33, 1
      %p103 = por %p101, %p102
      %p105 = scmp.ne.s32.totalorder %s90, %s104
      %p106 = scmp.eq.s32.totalorder %s33, 0
      %p107 = por %p105, %p106
      %s109 = sadd.s32 %s108, 1
      %p112 = scmp.eq.s32.totalorder %s27, 1
      %p113 = scmp.ne.s32.totalorder %s108, %s110
      %p114 = scmp.eq.s32.totalorder %s27, 0
      %p115 = por %p113, %p114
      %p116 = scmp.ne.s32.totalorder %s108, %s110
      %p117 = scmp.eq.s32.totalorder %s32, 1
      %p118 = por %p116, %p117
      %p119 = scmp.ne.s32.totalorder %s110, %s111
      %p120 = scmp.eq.s32.totalorder %s32, 0
      %p121 = por %p119, %p120
      %p122 = scmp.ne.s32.totalorder %s110, %s111
      %p123 = scmp.eq.s32.totalorder %s33, 1
      %p124 = por %p122, %p123
      %p126 = scmp.ne.s32.totalorder %s111, %s125
      %p127 = scmp.eq.s32.totalorder %s33, 0
      %p128 = por %p126, %p127
      %s130 = sadd.s32 %s129, 1
      %p133 = scmp.eq.s32.totalorder %s27, 1
      %p134 = scmp.ne.s32.totalorder %s129, %s131
      %p135 = scmp.eq.s32.totalorder %s27, 0
      %p136 = por %p134, %p135
      %p137 = scmp.ne.s32.totalorder %s129, %s131
      %p138 = scmp.eq.s32.totalorder %s32, 1
      %p139 = por %p137, %p138
      %p140 = scmp.ne.s32.totalorder %s131, %s132
      %p141 = scmp.eq.s32.totalorder %s32, 0
      %p142 = por %p140, %p141
      %p143 = scmp.ne.s32.totalorder %s131, %s132
      %p144 = scmp.eq.s32.totalorder %s33, 1
      %p145 = por %p143, %p144
      %p147 = scmp.ne.s32.totalorder %s132, %s146
      %p148 = scmp.eq.s32.totalorder %s33, 0
      %p149 = por %p147, %p148
      %s151 = sadd.s32 %s150, 1
      %p154 = scmp.eq.s32.totalorder %s27, 1
      %p155 = scmp.ne.s32.totalorder %s150, %s152
      %p156 = scmp.eq.s32.totalorder %s27, 0
      %p157 = por %p155, %p156
      %p158 = scmp.ne.s32.totalorder %s150, %s152
      %p159 = scmp.eq.s32.totalorder %s32, 1
      %p160 = por %p158, %p159
      %p161 = scmp.ne.s32.totalorder %s152, %s153
      %p162 = scmp.eq.s32.totalorder %s32, 0
      %p163 = por %p161, %p162
      %p164 = scmp.ne.s32.totalorder %s152, %s153
      %p165 = scmp.eq.s32.totalorder %s33, 1
      %p166 = por %p164, %p165
      %p168 = scmp.ne.s32.totalorder %s153, %s167
      %p169 = scmp.eq.s32.totalorder %s33, 0
      %p170 = por %p168, %p169
      %s172 = sadd.s32 %s171, 1
      %p175 = scmp.eq.s32.totalorder %s27, 1
      %p176 = scmp.ne.s32.totalorder %s171, %s173
      %p177 = scmp.eq.s32.totalorder %s27, 0
      %p178 = por %p176, %p177
      %p179 = scmp.ne.s32.totalorder %s171, %s173
      %p180 = scmp.eq.s32.totalorder %s32, 1
      %p181 = por %p179, %p180
      %p182 = scmp.ne.s32.totalorder %s173, %s174
      %p183 = scmp.eq.s32.totalorder %s32, 0
      %p184 = por %p182, %p183
      %p185 = scmp.ne.s32.totalorder %s173, %s174
      %p186 = scmp.eq.s32.totalorder %s33, 1
      %p187 = por %p185, %p186
      %p189 = scmp.ne.s32.totalorder %s174, %s188
      %p190 = scmp.eq.s32.totalorder %s33, 0
      %p191 = por %p189, %p190
      %s193 = sadd.s32 %s192, 1
      %p196 = scmp.eq.s32.totalorder %s27, 1
      %p197 = scmp.ne.s32.totalorder %s192, %s194
      %p198 = scmp.eq.s32.totalorder %s27, 0
      %p199 = por %p197, %p198
      %p200 = scmp.ne.s32.totalorder %s192, %s194
      %p201 = scmp.eq.s32.totalorder %s32, 1
      %p202 = por %p200, %p201
      %p203 = scmp.ne.s32.totalorder %s194, %s195
      %p204 = scmp.eq.s32.totalorder %s32, 0
      %p205 = por %p203, %p204
      %p206 = scmp.ne.s32.totalorder %s194, %s195
      %p207 = scmp.eq.s32.totalorder %s33, 1
      %p208 = por %p206, %p207
      %p210 = scmp.ne.s32.totalorder %s195, %s209
      %p211 = scmp.eq.s32.totalorder %s33, 0
      %p212 = por %p210, %p211
      %s214 = sadd.s32 %s213, 1
      %p217 = scmp.eq.s32.totalorder %s27, 1
      %p218 = scmp.ne.s32.totalorder %s213, %s215
      %p219 = scmp.eq.s32.totalorder %s27, 0
      %p220 = por %p218, %p219
      %p221 = scmp.ne.s32.totalorder %s213, %s215
      %p222 = scmp.eq.s32.totalorder %s32, 1
      %p223 = por %p221, %p222
      %p224 = scmp.ne.s32.totalorder %s215, %s216
      %p225 = scmp.eq.s32.totalorder %s32, 0
      %p226 = por %p224, %p225
      %p227 = scmp.ne.s32.totalorder %s215, %s216
      %p228 = scmp.eq.s32.totalorder %s33, 1
      %p229 = por %p227, %p228
      %p231 = scmp.ne.s32.totalorder %s216, %s230
      %p232 = scmp.eq.s32.totalorder %s33, 0
      %p233 = por %p231, %p232
      %s235 = sadd.s32 %s234, 1
      %p238 = scmp.eq.s32.totalorder %s27, 1
      %p239 = scmp.ne.s32.totalorder %s234, %s236
      %p240 = scmp.eq.s32.totalorder %s27, 0
      %p241 = por %p239, %p240
      %p242 = scmp.ne.s32.totalorder %s234, %s236
      %p243 = scmp.eq.s32.totalorder %s32, 1
      %p244 = por %p242, %p243
      %p245 = scmp.ne.s32.totalorder %s236, %s237
      %p246 = scmp.eq.s32.totalorder %s32, 0
      %p247 = por %p245, %p246
      %p248 = scmp.ne.s32.totalorder %s236, %s237
      %p249 = scmp.eq.s32.totalorder %s33, 1
      %p250 = por %p248, %p249
      %p252 = scmp.ne.s32.totalorder %s237, %s251
      %p253 = scmp.eq.s32.totalorder %s33, 0
      %p254 = por %p252, %p253
      %s255 = ssub.s32 %s27, %s34
      %p256 = scmp.eq.s32.totalorder %s255, 0
      %s258 = sadd.s32 %s257, 1
      %s259 = scalar_select %p256, %s257, %s258
      %p262 = pneg %p256
      %p263 = scmp.eq.s32.totalorder %s27, 1
      %p264 = por %p262, %p263
      %p265 = scmp.ne.s32.totalorder %s257, %s260
      %p266 = scmp.eq.s32.totalorder %s27, 0
      %p267 = por %p265, %p266
      %p268 = scmp.ne.s32.totalorder %s257, %s260
      %p269 = scmp.eq.s32.totalorder %s32, 1
      %p270 = por %p268, %p269
      %p271 = scmp.ne.s32.totalorder %s260, %s261
      %p272 = scmp.eq.s32.totalorder %s32, 0
      %p273 = por %p271, %p272
      %p274 = scmp.ne.s32.totalorder %s260, %s261
      %p275 = scmp.eq.s32.totalorder %s33, 1
      %p276 = por %p274, %p275
      %p278 = scmp.ne.s32.totalorder %s261, %s277
      %p279 = scmp.eq.s32.totalorder %s33, 0
      %p280 = por %p278, %p279
      %p281 = scmp.le.s32.totalorder 1, %s27
      %p282 = scmp.lt.s32.totalorder %s27, 3
      %p283 = pnand %p281, %p282
      %p284 = pneg %p283
      // Predicated region
      $region9: #{tpu_custom_call.1} parent=5 // pred_check
        _
      $region10: #{tpu_custom_call.1} parent=5 // pred_check_branch
        %286 = sbr.rel (%p283) target = $region12
      $region11: #{tpu_custom_call.1} parent=5 // pred_region
        %s287 = ssub.s32 %s27, 1
        // Predicated region
        $region13: #{tpu_custom_call.1} parent=11 // pred_check
          %p288 = pneg %p100
        $region14: #{tpu_custom_call.1} parent=11 // pred_check_branch
          %290 = sbr.rel (%p288) target = $region16
        $region15: #{tpu_custom_call.1} parent=11 // pred_region
          %s292 = ssub.s32 512, 512
          %293 = vsyncadd [#allocation6], %s292
          %s294 = sshll.u32 [#allocation7], 4
          %s295 = int_to_ptr.vmem [resolvable:$true] %s294
          %300 = dma.hbm_to_vmem [thread:$0]  %s2, 512, %s295, [#allocation6], 128, 128, 8
        $region16: #{tpu_custom_call.1} parent=11 // pred_fallthru
          _
        // Predicated region
        $region17: #{tpu_custom_call.1} parent=11 // pred_check
          %p301 = pneg %p121
        $region18: #{tpu_custom_call.1} parent=11 // pred_check_branch
          %303 = sbr.rel (%p301) target = $region20
        $region19: #{tpu_custom_call.1} parent=11 // pred_region
          %s305 = ssub.s32 512, 512
          %306 = vsyncadd [#allocation9], %s305
          %s307 = sshll.u32 [#allocation8], 4
          %s308 = int_to_ptr.vmem [resolvable:$true] %s307
          %313 = dma.hbm_to_vmem [thread:$0]  %s3, 512, %s308, [#allocation9], 128, 128, 8
        $region20: #{tpu_custom_call.1} parent=11 // pred_fallthru
          _
        // Predicated region
        $region21: #{tpu_custom_call.1} parent=11 // pred_check
          %p314 = pneg %p142
        $region22: #{tpu_custom_call.1} parent=11 // pred_check_branch
          %316 = sbr.rel (%p314) target = $region24
        $region23: #{tpu_custom_call.1} parent=11 // pred_region
          %s318 = ssub.s32 512, 512
          %319 = vsyncadd [#allocation9], %s318
          %s320 = sshll.u32 [#allocation10], 4
          %s321 = int_to_ptr.vmem [resolvable:$true] %s320
          %326 = dma.hbm_to_vmem [thread:$0]  %s4, 512, %s321, [#allocation9], 128, 128, 8
        $region24: #{tpu_custom_call.1} parent=11 // pred_fallthru
          _
        // Predicated region
        $region25: #{tpu_custom_call.1} parent=11 // pred_check
          %p327 = pneg %p163
        $region26: #{tpu_custom_call.1} parent=11 // pred_check_branch
          %329 = sbr.rel (%p327) target = $region28
        $region27: #{tpu_custom_call.1} parent=11 // pred_region
          %s331 = ssub.s32 512, 512
          %332 = vsyncadd [#allocation12], %s331
          %s333 = sshll.u32 [#allocation11], 4
          %s334 = int_to_ptr.vmem [resolvable:$true] %s333
          %339 = dma.hbm_to_vmem [thread:$0]  %s5, 512, %s334, [#allocation12], 128, 128, 8
        $region28: #{tpu_custom_call.1} parent=11 // pred_fallthru
          _
        // Predicated region
        $region29: #{tpu_custom_call.1} parent=11 // pred_check
          %p340 = pneg %p184
        $region30: #{tpu_custom_call.1} parent=11 // pred_check_branch
          %342 = sbr.rel (%p340) target = $region32
        $region31: #{tpu_custom_call.1} parent=11 // pred_region
          _
        $region32: #{tpu_custom_call.1} parent=11 // pred_fallthru
          _
        // Predicated region
        $region33: #{tpu_custom_call.1} parent=11 // pred_check
          %p343 = pneg %p205
        $region34: #{tpu_custom_call.1} parent=11 // pred_check_branch
          %345 = sbr.rel (%p343) target = $region36
        $region35: #{tpu_custom_call.1} parent=11 // pred_region
          _
        $region36: #{tpu_custom_call.1} parent=11 // pred_fallthru
          _
        // Predicated region
        $region37: #{tpu_custom_call.1} parent=11 // pred_check
          %p346 = pneg %p226
        $region38: #{tpu_custom_call.1} parent=11 // pred_check_branch
          %348 = sbr.rel (%p346) target = $region40
        $region39: #{tpu_custom_call.1} parent=11 // pred_region
          _
        $region40: #{tpu_custom_call.1} parent=11 // pred_fallthru
          _
        // Predicated region
        $region41: #{tpu_custom_call.1} parent=11 // pred_check
          %p349 = pneg %p247
        $region42: #{tpu_custom_call.1} parent=11 // pred_check_branch
          %351 = sbr.rel (%p349) target = $region44
        $region43: #{tpu_custom_call.1} parent=11 // pred_region
          _
        $region44: #{tpu_custom_call.1} parent=11 // pred_fallthru
          _
      $region12: #{tpu_custom_call.1} parent=5 // pred_fallthru
        _
      %p352 = scmp.lt.s32.totalorder %s27, 2
      // Predicated region
      $region45: #{tpu_custom_call.1} parent=5 // pred_check
        %p353 = pneg %p352
      $region46: #{tpu_custom_call.1} parent=5 // pred_check_branch
        %355 = sbr.rel (%p353) target = $region48
      $region47: #{tpu_custom_call.1} parent=5 // pred_region
        // Predicated region
        $region49: #{tpu_custom_call.1} parent=47 // pred_check
          %p356 = pneg %p47
        $region50: #{tpu_custom_call.1} parent=47 // pred_check_branch
          %358 = sbr.rel (%p356) target = $region52
        $region51: #{tpu_custom_call.1} parent=47 // pred_region
          %s359 = sand.u32 %s37, 1
          %s360 = scalar_lea.sflag [#allocation3], %s359
          %s361 = sand.u32 %s37, 1
          %s362 = smul.addr %s361, 16
          %s363 = scalar_lea.vmem [#allocation2], %s362
          %s365 = ssub.s32 256, 256
          %366 = vsyncadd %s360, %s365
          %s367 = smul.addr %s27, 2
          %s368 = smul.addr %s367, 128
          %s369 = scalar_lea.hbm %s0, %s368
          %s370 = sshll.u32 %s363, 4
          %s371 = int_to_ptr.vmem [resolvable:$true] %s370
          %376 = dma.hbm_to_vmem [thread:$0]  %s369, 256, %s371, %s360, 128, 128, 8
        $region52: #{tpu_custom_call.1} parent=47 // pred_fallthru
          _
        // Predicated region
        $region53: #{tpu_custom_call.1} parent=47 // pred_check
          %p377 = pneg %p73
        $region54: #{tpu_custom_call.1} parent=47 // pred_check_branch
          %379 = sbr.rel (%p377) target = $region56
        $region55: #{tpu_custom_call.1} parent=47 // pred_region
          %s380 = sand.u32 %s27, 1
          %s381 = scalar_lea.sflag [#allocation6], %s380
          %s382 = sand.u32 %s63, 1
          %s383 = smul.addr %s382, 16
          %s384 = scalar_lea.vmem [#allocation5], %s383
          %s386 = ssub.s32 256, 256
          %387 = vsyncadd %s381, %s386
          %s388 = smul.addr %s27, 2
          %s389 = smul.addr %s388, 128
          %s390 = scalar_lea.hbm %s1, %s389
          %s391 = sshll.u32 %s384, 4
          %s392 = int_to_ptr.vmem [resolvable:$true] %s391
          %397 = dma.hbm_to_vmem [thread:$0]  %s390, 256, %s392, %s381, 128, 128, 8
        $region56: #{tpu_custom_call.1} parent=47 // pred_fallthru
          _
      $region48: #{tpu_custom_call.1} parent=5 // pred_fallthru
        _
      %p398 = scmp.le.s32.totalorder 1, %s27
      %p399 = scmp.lt.s32.totalorder %s27, 3
      %p400 = pnand %p398, %p399
      %p401 = pneg %p400
      // Predicated region
      $region57: #{tpu_custom_call.1} parent=5 // pred_check
        _
      $region58: #{tpu_custom_call.1} parent=5 // pred_check_branch
        %403 = sbr.rel (%p400) target = $region60
      $region59: #{tpu_custom_call.1} parent=5 // pred_region
        %s404 = ssub.s32 %s27, 1
        %s405 = sand.u32 %s40, 1
        %s406 = scalar_lea.sflag [#allocation3], %s405
        %s407 = sand.u32 %s40, 1
        %s408 = smul.addr %s407, 16
        %s409 = scalar_lea.vmem [#allocation2], %s408
        // Predicated region
        $region61: #{tpu_custom_call.1} parent=59 // pred_check
          %p410 = pneg %p53
        $region62: #{tpu_custom_call.1} parent=59 // pred_check_branch
          %412 = sbr.rel (%p410) target = $region64
        $region63: #{tpu_custom_call.1} parent=59 // pred_region
          %413 = dma.done %s406, 256
        $region64: #{tpu_custom_call.1} parent=59 // pred_fallthru
          _
        %s414 = sand.u32 %s32, 1
        %s415 = scalar_lea.sflag [#allocation6], %s414
        %s416 = sand.u32 %s66, 1
        %s417 = smul.addr %s416, 16
        %s418 = scalar_lea.vmem [#allocation5], %s417
        // Predicated region
        $region65: #{tpu_custom_call.1} parent=59 // pred_check
          %p419 = pneg %p79
        $region66: #{tpu_custom_call.1} parent=59 // pred_check_branch
          %421 = sbr.rel (%p419) target = $region68
        $region67: #{tpu_custom_call.1} parent=59 // pred_region
          %422 = dma.done %s415, 256
        $region68: #{tpu_custom_call.1} parent=59 // pred_fallthru
          _
        // Predicated region
        $region69: #{tpu_custom_call.1} parent=59 // pred_check
          %p423 = pneg %p100
        $region70: #{tpu_custom_call.1} parent=59 // pred_check_branch
          %425 = sbr.rel (%p423) target = $region72
        $region71: #{tpu_custom_call.1} parent=59 // pred_region
          %426 = dma.done [#allocation6], 512
        $region72: #{tpu_custom_call.1} parent=59 // pred_fallthru
          _
        // Predicated region
        $region73: #{tpu_custom_call.1} parent=59 // pred_check
          %p427 = pneg %p121
        $region74: #{tpu_custom_call.1} parent=59 // pred_check_branch
          %429 = sbr.rel (%p427) target = $region76
        $region75: #{tpu_custom_call.1} parent=59 // pred_region
          %430 = dma.done [#allocation9], 512
        $region76: #{tpu_custom_call.1} parent=59 // pred_fallthru
          _
        // Predicated region
        $region77: #{tpu_custom_call.1} parent=59 // pred_check
          %p431 = pneg %p142
        $region78: #{tpu_custom_call.1} parent=59 // pred_check_branch
          %433 = sbr.rel (%p431) target = $region80
        $region79: #{tpu_custom_call.1} parent=59 // pred_region
          %434 = dma.done [#allocation9], 512
        $region80: #{tpu_custom_call.1} parent=59 // pred_fallthru
          _
        // Predicated region
        $region81: #{tpu_custom_call.1} parent=59 // pred_check
          %p435 = pneg %p163
        $region82: #{tpu_custom_call.1} parent=59 // pred_check_branch
          %437 = sbr.rel (%p435) target = $region84
        $region83: #{tpu_custom_call.1} parent=59 // pred_region
          %438 = dma.done [#allocation12], 512
        $region84: #{tpu_custom_call.1} parent=59 // pred_fallthru
          _
        %s439 = sand.u32 %s40, 1
        %s440 = scalar_lea.sflag [#allocation3], %s439
        %s441 = sand.u32 %s40, 1
        %s442 = smul.addr %s441, 16
        %s443 = scalar_lea.vmem [#allocation2], %s442
        %p444 = pneg %p53
        %p445 = pneg %p50
        %s446 = sand.u32 %s32, 1
        %s447 = scalar_lea.sflag [#allocation6], %s446
        %s448 = sand.u32 %s66, 1
        %s449 = smul.addr %s448, 16
        %s450 = scalar_lea.vmem [#allocation5], %s449
        %p451 = pneg %p79
        %p452 = pneg %p76
        %p453 = pneg %p100
        %p454 = pneg %p97
        %p455 = pneg %p121
        %p456 = pneg %p118
        %p457 = pneg %p142
        %p458 = pneg %p139
        %p459 = pneg %p163
        %p460 = pneg %p160
        %p461 = pneg %p184
        %p462 = pneg %p181
        %p463 = pneg %p205
        %p464 = pneg %p202
        %p465 = pneg %p226
        %p466 = pneg %p223
        %p467 = pneg %p247
        %p468 = pneg %p244
        %p469 = pneg %p273
        %p470 = pneg %p270
        %s471 = sand.u32 %s260, 1
        %s472 = scalar_lea.sflag [#allocation4], %s471
        %s473 = sand.u32 %s260, 1
        %s474 = smul.addr %s473, 16
        %s475 = scalar_lea.vmem [#allocation13], %s474
        %v476 = vld [vmem:[%s409] sm:$0xff]
        %v477 = vld [vmem:[%s409 + $0x8] sm:$0xff]
        %v478 = vld [vmem:[%s418] sm:$0xff]
        %v479 = vld [vmem:[%s418 + $0x8] sm:$0xff]
        %v480 = vld [vmem:[#allocation7] sm:$0xff]
        %v481 = vld [vmem:[#allocation7 + $0x8] sm:$0xff]
        %v482 = vld [vmem:[#allocation7 + $0x10] sm:$0xff]
        %v483 = vld [vmem:[#allocation7 + $0x18] sm:$0xff]
        %v484 = vld [vmem:[%s6] sm:$0x1]
        %v486 = vlaneseq
        %v487 = vshrl.u32 %v486, 7
        %v488 = vsub.s32 0, %v487
        %v489 = vrot.slane %v484, %v488
        %vm491 = vcmask 261120
        %v493 = vsel %vm491, %v476, 0
        %v496 = vsel %vm491, %v477, 0
        %v499 = vsel %vm491, %v480, 0
        %v502 = vsel %vm491, %v481, 0
        %v505 = vsel %vm491, %v482, 0
        %v508 = vsel %vm491, %v483, 0
        %510 = vmatprep.subr.mxu0 0.0
        %511 = vmatpush1.xpose.msra.mxu0 %v499
        %512 = vmatprep.subr.mxu0 0.0
        %513 = vmatpush1.xpose.msra.mxu0 %v502
        %514 = vmatprep.subr.mxu0 0.0
        %515 = vmatpush1.xpose.msra.mxu0 %v505
        %516 = vmatprep.subr.mxu0 0.0
        %517 = vmatpush1.xpose.msra.mxu0 %v508
        %518 = vmatprep.subr.mxu0 0.0
        %519 = vmatpush1.xpose.msra.mxu0 0.0
        %520 = vmatprep.subr.mxu0 0.0
        %521 = vmatpush1.xpose.msra.mxu0 0.0
        %522 = vmatprep.subr.mxu0 0.0
        %523 = vmatpush1.xpose.msra.mxu0 0.0
        %524 = vmatprep.subr.mxu0 0.0
        %525 = vmatpush1.xpose.msra.mxu0 0.0
        %526 = vmatprep.subr.mxu0 0.0
        %527 = vmatpush1.xpose.msra.mxu0 0.0
        %528 = vmatprep.subr.mxu0 0.0
        %529 = vmatpush1.xpose.msra.mxu0 0.0
        %530 = vmatprep.subr.mxu0 0.0
        %531 = vmatpush1.xpose.msra.mxu0 0.0
        %532 = vmatprep.subr.mxu0 0.0
        %533 = vmatpush1.xpose.msra.mxu0 0.0
        %534 = vmatprep.subr.mxu0 0.0
        %535 = vmatpush1.xpose.msra.mxu0 0.0
        %536 = vmatprep.subr.mxu0 0.0
        %537 = vmatpush1.xpose.msra.mxu0 0.0
        %538 = vmatprep.subr.mxu0 0.0
        %539 = vmatpush1.xpose.msra.mxu0 0.0
        %540 = vmatprep.subr.mxu0 0.0
        %541 = vmatpush1.xpose.msra.mxu0 0.0
        %542 = vmatprep.subr.mxu0 0.0
        %543 = vmatpush1.xpose.msra.mxu0 0.0
        %544 = vmatprep.subr.mxu0 0.0
        %545 = vmatpush1.xpose.msra.mxu0 0.0
        %546 = vmatprep.subr.mxu0 0.0
        %547 = vmatpush1.xpose.msra.mxu0 0.0
        %548 = vmatprep.subr.mxu0 0.0
        %549 = vmatpush1.xpose.msra.mxu0 0.0
        %550 = vmatprep.subr.mxu0 0.0
        %551 = vmatpush1.xpose.msra.mxu0 0.0
        %552 = vmatprep.subr.mxu0 0.0
        %553 = vmatpush1.xpose.msra.mxu0 0.0
        %554 = vmatprep.subr.mxu0 0.0
        %555 = vmatpush1.xpose.msra.mxu0 0.0
        %556 = vmatprep.subr.mxu0 0.0
        %557 = vmatpush1.xpose.msra.mxu0 0.0
        %558 = vmatprep.subr.mxu0 0.0
        %559 = vmatpush1.xpose.msra.mxu0 0.0
        %560 = vmatprep.subr.mxu0 0.0
        %561 = vmatpush1.xpose.msra.mxu0 0.0
        %562 = vmatprep.subr.mxu0 0.0
        %563 = vmatpush1.xpose.msra.mxu0 0.0
        %564 = vmatprep.subr.mxu0 0.0
        %565 = vmatpush1.xpose.msra.mxu0 0.0
        %566 = vmatprep.subr.mxu0 0.0
        %567 = vmatpush1.xpose.msra.mxu0 0.0
        %568 = vmatprep.subr.mxu0 0.0
        %569 = vmatpush1.xpose.msra.mxu0 0.0
        %570 = vmatprep.subr.mxu0 0.0
        %571 = vmatpush1.xpose.msra.mxu0 0.0
        %572 = vmatprep.subr.mxu0 0.0
        %573 = vmatpush1.xpose.msra.mxu0 0.0
        %574 = vmatprep.mubr.f32.mxu0 0.0
        %575 = vmatmul.mubr.f32.gmra.mrb[0].mxu0 %v493
        %v576 = vpop.f32.mrb[0].mxu0
        %v577 = vadd.f32 %v489, %v576
        %v578 = vpop.f32.mrb[0].mxu0
        %579 = vmatprep.mubr.f32.mxu0 0.0
        %580 = vmatmul.mubr.f32.gmra.mrb[0].mxu0 %v496
        %v581 = vpop.f32.mrb[0].mxu0
        %v582 = vadd.f32 %v489, %v581
        %v583 = vpop.f32.mrb[0].mxu0
        %584 = vdwg.mxu0
        %v585 = vld [vmem:[#allocation8] sm:$0xff]
        %v586 = vld [vmem:[#allocation8 + $0x8] sm:$0xff]
        %v587 = vld [vmem:[#allocation8 + $0x10] sm:$0xff]
        %v588 = vld [vmem:[#allocation8 + $0x18] sm:$0xff]
        %v589 = vld [vmem:[%s7] sm:$0x1]
        %v591 = vlaneseq
        %v592 = vshrl.u32 %v591, 7
        %v593 = vsub.s32 0, %v592
        %v594 = vrot.slane %v589, %v593
        %v597 = vsel %vm491, %v478, 0
        %v600 = vsel %vm491, %v479, 0
        %v603 = vsel %vm491, %v585, 0
        %v606 = vsel %vm491, %v586, 0
        %v609 = vsel %vm491, %v587, 0
        %v612 = vsel %vm491, %v588, 0
        %614 = vmatprep.subr.mxu0 0.0
        %615 = vmatpush1.xpose.msra.mxu0 %v603
        %616 = vmatprep.subr.mxu0 0.0
        %617 = vmatpush1.xpose.msra.mxu0 %v606
        %618 = vmatprep.subr.mxu0 0.0
        %619 = vmatpush1.xpose.msra.mxu0 %v609
        %620 = vmatprep.subr.mxu0 0.0
        %621 = vmatpush1.xpose.msra.mxu0 %v612
        %622 = vmatprep.subr.mxu0 0.0
        %623 = vmatpush1.xpose.msra.mxu0 0.0
        %624 = vmatprep.subr.mxu0 0.0
        %625 = vmatpush1.xpose.msra.mxu0 0.0
        %626 = vmatprep.subr.mxu0 0.0
        %627 = vmatpush1.xpose.msra.mxu0 0.0
        %628 = vmatprep.subr.mxu0 0.0
        %629 = vmatpush1.xpose.msra.mxu0 0.0
        %630 = vmatprep.subr.mxu0 0.0
        %631 = vmatpush1.xpose.msra.mxu0 0.0
        %632 = vmatprep.subr.mxu0 0.0
        %633 = vmatpush1.xpose.msra.mxu0 0.0
        %634 = vmatprep.subr.mxu0 0.0
        %635 = vmatpush1.xpose.msra.mxu0 0.0
        %636 = vmatprep.subr.mxu0 0.0
        %637 = vmatpush1.xpose.msra.mxu0 0.0
        %638 = vmatprep.subr.mxu0 0.0
        %639 = vmatpush1.xpose.msra.mxu0 0.0
        %640 = vmatprep.subr.mxu0 0.0
        %641 = vmatpush1.xpose.msra.mxu0 0.0
        %642 = vmatprep.subr.mxu0 0.0
        %643 = vmatpush1.xpose.msra.mxu0 0.0
        %644 = vmatprep.subr.mxu0 0.0
        %645 = vmatpush1.xpose.msra.mxu0 0.0
        %646 = vmatprep.subr.mxu0 0.0
        %647 = vmatpush1.xpose.msra.mxu0 0.0
        %648 = vmatprep.subr.mxu0 0.0
        %649 = vmatpush1.xpose.msra.mxu0 0.0
        %650 = vmatprep.subr.mxu0 0.0
        %651 = vmatpush1.xpose.msra.mxu0 0.0
        %652 = vmatprep.subr.mxu0 0.0
        %653 = vmatpush1.xpose.msra.mxu0 0.0
        %654 = vmatprep.subr.mxu0 0.0
        %655 = vmatpush1.xpose.msra.mxu0 0.0
        %656 = vmatprep.subr.mxu0 0.0
        %657 = vmatpush1.xpose.msra.mxu0 0.0
        %658 = vmatprep.subr.mxu0 0.0
        %659 = vmatpush1.xpose.msra.mxu0 0.0
        %660 = vmatprep.subr.mxu0 0.0
        %661 = vmatpush1.xpose.msra.mxu0 0.0
        %662 = vmatprep.subr.mxu0 0.0
        %663 = vmatpush1.xpose.msra.mxu0 0.0
        %664 = vmatprep.subr.mxu0 0.0
        %665 = vmatpush1.xpose.msra.mxu0 0.0
        %666 = vmatprep.subr.mxu0 0.0
        %667 = vmatpush1.xpose.msra.mxu0 0.0
        %668 = vmatprep.subr.mxu0 0.0
        %669 = vmatpush1.xpose.msra.mxu0 0.0
        %670 = vmatprep.subr.mxu0 0.0
        %671 = vmatpush1.xpose.msra.mxu0 0.0
        %672 = vmatprep.subr.mxu0 0.0
        %673 = vmatpush1.xpose.msra.mxu0 0.0
        %674 = vmatprep.subr.mxu0 0.0
        %675 = vmatpush1.xpose.msra.mxu0 0.0
        %676 = vmatprep.subr.mxu0 0.0
        %677 = vmatpush1.xpose.msra.mxu0 0.0
        %678 = vmatprep.mubr.f32.mxu0 0.0
        %679 = vmatmul.mubr.f32.gmra.mrb[0].mxu0 %v597
        %v680 = vpop.f32.mrb[0].mxu0
        %v681 = vadd.f32 %v594, %v680
        %v682 = vpop.f32.mrb[0].mxu0
        %683 = vmatprep.mubr.f32.mxu0 0.0
        %684 = vmatmul.mubr.f32.gmra.mrb[0].mxu0 %v600
        %v685 = vpop.f32.mrb[0].mxu0
        %v686 = vadd.f32 %v594, %v685
        %v687 = vpop.f32.mrb[0].mxu0
        %688 = vdwg.mxu0
        %v689 = vld [vmem:[#allocation10] sm:$0xff]
        %v690 = vld [vmem:[#allocation10 + $0x8] sm:$0xff]
        %v691 = vld [vmem:[#allocation10 + $0x10] sm:$0xff]
        %v692 = vld [vmem:[#allocation10 + $0x18] sm:$0xff]
        %v693 = vld [vmem:[%s8] sm:$0x1]
        %v695 = vlaneseq
        %v696 = vshrl.u32 %v695, 7
        %v697 = vsub.s32 0, %v696
        %v698 = vrot.slane %v693, %v697
        %v701 = vsel %vm491, %v689, 0
        %v704 = vsel %vm491, %v690, 0
        %v707 = vsel %vm491, %v691, 0
        %v710 = vsel %vm491, %v692, 0
        %712 = vmatprep.subr.mxu0 0.0
        %713 = vmatpush1.xpose.msra.mxu0 %v701
        %714 = vmatprep.subr.mxu0 0.0
        %715 = vmatpush1.xpose.msra.mxu0 %v704
        %716 = vmatprep.subr.mxu0 0.0
        %717 = vmatpush1.xpose.msra.mxu0 %v707
        %718 = vmatprep.subr.mxu0 0.0
        %719 = vmatpush1.xpose.msra.mxu0 %v710
        %720 = vmatprep.subr.mxu0 0.0
        %721 = vmatpush1.xpose.msra.mxu0 0.0
        %722 = vmatprep.subr.mxu0 0.0
        %723 = vmatpush1.xpose.msra.mxu0 0.0
        %724 = vmatprep.subr.mxu0 0.0
        %725 = vmatpush1.xpose.msra.mxu0 0.0
        %726 = vmatprep.subr.mxu0 0.0
        %727 = vmatpush1.xpose.msra.mxu0 0.0
        %728 = vmatprep.subr.mxu0 0.0
        %729 = vmatpush1.xpose.msra.mxu0 0.0
        %730 = vmatprep.subr.mxu0 0.0
        %731 = vmatpush1.xpose.msra.mxu0 0.0
        %732 = vmatprep.subr.mxu0 0.0
        %733 = vmatpush1.xpose.msra.mxu0 0.0
        %734 = vmatprep.subr.mxu0 0.0
        %735 = vmatpush1.xpose.msra.mxu0 0.0
        %736 = vmatprep.subr.mxu0 0.0
        %737 = vmatpush1.xpose.msra.mxu0 0.0
        %738 = vmatprep.subr.mxu0 0.0
        %739 = vmatpush1.xpose.msra.mxu0 0.0
        %740 = vmatprep.subr.mxu0 0.0
        %741 = vmatpush1.xpose.msra.mxu0 0.0
        %742 = vmatprep.subr.mxu0 0.0
        %743 = vmatpush1.xpose.msra.mxu0 0.0
        %744 = vmatprep.subr.mxu0 0.0
        %745 = vmatpush1.xpose.msra.mxu0 0.0
        %746 = vmatprep.subr.mxu0 0.0
        %747 = vmatpush1.xpose.msra.mxu0 0.0
        %748 = vmatprep.subr.mxu0 0.0
        %749 = vmatpush1.xpose.msra.mxu0 0.0
        %750 = vmatprep.subr.mxu0 0.0
        %751 = vmatpush1.xpose.msra.mxu0 0.0
        %752 = vmatprep.subr.mxu0 0.0
        %753 = vmatpush1.xpose.msra.mxu0 0.0
        %754 = vmatprep.subr.mxu0 0.0
        %755 = vmatpush1.xpose.msra.mxu0 0.0
        %756 = vmatprep.subr.mxu0 0.0
        %757 = vmatpush1.xpose.msra.mxu0 0.0
        %758 = vmatprep.subr.mxu0 0.0
        %759 = vmatpush1.xpose.msra.mxu0 0.0
        %760 = vmatprep.subr.mxu0 0.0
        %761 = vmatpush1.xpose.msra.mxu0 0.0
        %762 = vmatprep.subr.mxu0 0.0
        %763 = vmatpush1.xpose.msra.mxu0 0.0
        %764 = vmatprep.subr.mxu0 0.0
        %765 = vmatpush1.xpose.msra.mxu0 0.0
        %766 = vmatprep.subr.mxu0 0.0
        %767 = vmatpush1.xpose.msra.mxu0 0.0
        %768 = vmatprep.subr.mxu0 0.0
        %769 = vmatpush1.xpose.msra.mxu0 0.0
        %770 = vmatprep.subr.mxu0 0.0
        %771 = vmatpush1.xpose.msra.mxu0 0.0
        %772 = vmatprep.subr.mxu0 0.0
        %773 = vmatpush1.xpose.msra.mxu0 0.0
        %774 = vmatprep.subr.mxu0 0.0
        %775 = vmatpush1.xpose.msra.mxu0 0.0
        %776 = vmatprep.mubr.f32.mxu0 0.0
        %777 = vmatmul.mubr.f32.gmra.mrb[0].mxu0 %v597
        %v778 = vpop.f32.mrb[0].mxu0
        %v779 = vadd.f32 %v698, %v778
        %v780 = vpop.f32.mrb[0].mxu0
        %781 = vmatprep.mubr.f32.mxu0 0.0
        %782 = vmatmul.mubr.f32.gmra.mrb[0].mxu0 %v600
        %v783 = vpop.f32.mrb[0].mxu0
        %v784 = vadd.f32 %v698, %v783
        %v785 = vpop.f32.mrb[0].mxu0
        %786 = vdwg.mxu0
        %v787 = vld [vmem:[#allocation11] sm:$0xff]
        %v788 = vld [vmem:[#allocation11 + $0x8] sm:$0xff]
        %v789 = vld [vmem:[#allocation11 + $0x10] sm:$0xff]
        %v790 = vld [vmem:[#allocation11 + $0x18] sm:$0xff]
        %vm791 = vcmask 64512
        %v793 = vsel %vm791, %v577, 0
        %v796 = vsel %vm791, %v582, 0
        %v799 = vsel %vm791, %v681, 0
        %v802 = vsel %vm791, %v686, 0
        %804 = vmatprep.subr.mxu0 0.0
        %805 = vmatpush1.xpose.msra.mxu0 %v799
        %806 = vmatprep.subr.mxu0 0.0
        %807 = vmatpush1.xpose.msra.mxu0 %v802
        %808 = vmatprep.subr.mxu0 0.0
        %809 = vmatpush1.xpose.msra.mxu0 0.0
        %810 = vmatprep.subr.mxu0 0.0
        %811 = vmatpush1.xpose.msra.mxu0 0.0
        %812 = vmatprep.subr.mxu0 0.0
        %813 = vmatpush1.xpose.msra.mxu0 0.0
        %814 = vmatprep.subr.mxu0 0.0
        %815 = vmatpush1.xpose.msra.mxu0 0.0
        %816 = vmatprep.subr.mxu0 0.0
        %817 = vmatpush1.xpose.msra.mxu0 0.0
        %818 = vmatprep.subr.mxu0 0.0
        %819 = vmatpush1.xpose.msra.mxu0 0.0
        %820 = vmatprep.subr.mxu0 0.0
        %821 = vmatpush1.xpose.msra.mxu0 0.0
        %822 = vmatprep.subr.mxu0 0.0
        %823 = vmatpush1.xpose.msra.mxu0 0.0
        %824 = vmatprep.subr.mxu0 0.0
        %825 = vmatpush1.xpose.msra.mxu0 0.0
        %826 = vmatprep.subr.mxu0 0.0
        %827 = vmatpush1.xpose.msra.mxu0 0.0
        %828 = vmatprep.subr.mxu0 0.0
        %829 = vmatpush1.xpose.msra.mxu0 0.0
        %830 = vmatprep.subr.mxu0 0.0
        %831 = vmatpush1.xpose.msra.mxu0 0.0
        %832 = vmatprep.subr.mxu0 0.0
        %833 = vmatpush1.xpose.msra.mxu0 0.0
        %834 = vmatprep.subr.mxu0 0.0
        %835 = vmatpush1.xpose.msra.mxu0 0.0
        %836 = vmatprep.subr.mxu0 0.0
        %837 = vmatpush1.xpose.msra.mxu0 0.0
        %838 = vmatprep.subr.mxu0 0.0
        %839 = vmatpush1.xpose.msra.mxu0 0.0
        %840 = vmatprep.subr.mxu0 0.0
        %841 = vmatpush1.xpose.msra.mxu0 0.0
        %842 = vmatprep.subr.mxu0 0.0
        %843 = vmatpush1.xpose.msra.mxu0 0.0
        %844 = vmatprep.subr.mxu0 0.0
        %845 = vmatpush1.xpose.msra.mxu0 0.0
        %846 = vmatprep.subr.mxu0 0.0
        %847 = vmatpush1.xpose.msra.mxu0 0.0
        %848 = vmatprep.subr.mxu0 0.0
        %849 = vmatpush1.xpose.msra.mxu0 0.0
        %850 = vmatprep.subr.mxu0 0.0
        %851 = vmatpush1.xpose.msra.mxu0 0.0
        %852 = vmatprep.subr.mxu0 0.0
        %853 = vmatpush1.xpose.msra.mxu0 0.0
        %854 = vmatprep.subr.mxu0 0.0
        %855 = vmatpush1.xpose.msra.mxu0 0.0
        %856 = vmatprep.subr.mxu0 0.0
        %857 = vmatpush1.xpose.msra.mxu0 0.0
        %858 = vmatprep.subr.mxu0 0.0
        %859 = vmatpush1.xpose.msra.mxu0 0.0
        %860 = vmatprep.subr.mxu0 0.0
        %861 = vmatpush1.xpose.msra.mxu0 0.0
        %862 = vmatprep.subr.mxu0 0.0
        %863 = vmatpush1.xpose.msra.mxu0 0.0
        %864 = vmatprep.subr.mxu0 0.0
        %865 = vmatpush1.xpose.msra.mxu0 0.0
        %866 = vmatprep.subr.mxu0 0.0
        %867 = vmatpush1.xpose.msra.mxu0 0.0
        %868 = vmatprep.mubr.f32.mxu0 0.0
        %869 = vmatmul.mubr.f32.gmra.mrb[0].mxu0 %v793
        %v870 = vpop.f32.mrb[0].mxu0
        %v871 = vadd.f32 0.0, %v870
        %v872 = vpop.f32.mrb[0].mxu0
        %873 = vmatprep.mubr.f32.mxu0 0.0
        %874 = vmatmul.mubr.f32.gmra.mrb[0].mxu0 %v796
        %v875 = vpop.f32.mrb[0].mxu0
        %v876 = vadd.f32 0.0, %v875
        %v877 = vpop.f32.mrb[0].mxu0
        %878 = vdwg.mxu0
        %v879 = vmul.f32 %v871, 0.35355338
        %v880 = vmul.f32 %v876, 0.35355338
        %vm881 = vcmask 130048
        %v882 = vsel %vm881, %v879, -inf
        %883 = vmax.xlane.f32.xlu0 %v882
        %v884 = vpop.xlane.xlu0 %883
        %v885 = vsel %vm881, %v880, -inf
        %886 = vmax.xlane.f32.xlu0 %v885
        %v887 = vpop.xlane.xlu0 %886
        %v888 = vsub.f32 %v879, %v884
        %v889 = vsub.f32 %v880, %v887
        %v890 = vmul.f32 %v888, 1.442695
        %v891 = vpow.pop %v890
        %v892 = vmul.f32 %v889, 1.442695
        %v893 = vpow.pop %v892
        %v894 = vsel %vm881, %v891, 0.0
        %895 = vadd.xlane.f32.xlu0 %v894
        %v896 = vpop.xlane.xlu0 %895
        %v897 = vsel %vm881, %v893, 0.0
        %898 = vadd.xlane.f32.xlu0 %v897
        %v899 = vpop.xlane.xlu0 %898
        %v900 = vrcp.pop %v896
        %v901 = vrcp.pop %v899
        %v902 = vmul.f32 %v891, %v900
        %v903 = vmul.f32 %v893, %v901
        %v905 = vsel %vm881, %v902, 0
        %v908 = vsel %vm881, %v903, 0
        %910 = vmatprep.subr.mxu0 0.0
        %911 = vmatpush1.msra.mxu0 %v779
        %912 = vmatprep.subr.mxu0 0.0
        %913 = vmatpush1.msra.mxu0 %v784
        %914 = vmatprep.subr.mxu0 0.0
        %915 = vmatpush1.msra.mxu0 0.0
        %916 = vmatprep.subr.mxu0 0.0
        %917 = vmatpush1.msra.mxu0 0.0
        %918 = vmatprep.subr.mxu0 0.0
        %919 = vmatpush1.msra.mxu0 0.0
        %920 = vmatprep.subr.mxu0 0.0
        %921 = vmatpush1.msra.mxu0 0.0
        %922 = vmatprep.subr.mxu0 0.0
        %923 = vmatpush1.msra.mxu0 0.0
        %924 = vmatprep.subr.mxu0 0.0
        %925 = vmatpush1.msra.mxu0 0.0
        %926 = vmatprep.subr.mxu0 0.0
        %927 = vmatpush1.msra.mxu0 0.0
        %928 = vmatprep.subr.mxu0 0.0
        %929 = vmatpush1.msra.mxu0 0.0
        %930 = vmatprep.subr.mxu0 0.0
        %931 = vmatpush1.msra.mxu0 0.0
        %932 = vmatprep.subr.mxu0 0.0
        %933 = vmatpush1.msra.mxu0 0.0
        %934 = vmatprep.subr.mxu0 0.0
        %935 = vmatpush1.msra.mxu0 0.0
        %936 = vmatprep.subr.mxu0 0.0
        %937 = vmatpush1.msra.mxu0 0.0
        %938 = vmatprep.subr.mxu0 0.0
        %939 = vmatpush1.msra.mxu0 0.0
        %940 = vmatprep.subr.mxu0 0.0
        %941 = vmatpush1.msra.mxu0 0.0
        %942 = vmatprep.subr.mxu0 0.0
        %943 = vmatpush1.msra.mxu0 0.0
        %944 = vmatprep.subr.mxu0 0.0
        %945 = vmatpush1.msra.mxu0 0.0
        %946 = vmatprep.subr.mxu0 0.0
        %947 = vmatpush1.msra.mxu0 0.0
        %948 = vmatprep.subr.mxu0 0.0
        %949 = vmatpush1.msra.mxu0 0.0
        %950 = vmatprep.subr.mxu0 0.0
        %951 = vmatpush1.msra.mxu0 0.0
        %952 = vmatprep.subr.mxu0 0.0
        %953 = vmatpush1.msra.mxu0 0.0
        %954 = vmatprep.subr.mxu0 0.0
        %955 = vmatpush1.msra.mxu0 0.0
        %956 = vmatprep.subr.mxu0 0.0
        %957 = vmatpush1.msra.mxu0 0.0
        %958 = vmatprep.subr.mxu0 0.0
        %959 = vmatpush1.msra.mxu0 0.0
        %960 = vmatprep.subr.mxu0 0.0
        %961 = vmatpush1.msra.mxu0 0.0
        %962 = vmatprep.subr.mxu0 0.0
        %963 = vmatpush1.msra.mxu0 0.0
        %964 = vmatprep.subr.mxu0 0.0
        %965 = vmatpush1.msra.mxu0 0.0
        %966 = vmatprep.subr.mxu0 0.0
        %967 = vmatpush1.msra.mxu0 0.0
        %968 = vmatprep.subr.mxu0 0.0
        %969 = vmatpush1.msra.mxu0 0.0
        %970 = vmatprep.subr.mxu0 0.0
        %971 = vmatpush1.msra.mxu0 0.0
        %972 = vmatprep.subr.mxu0 0.0
        %973 = vmatpush1.msra.mxu0 0.0
        %974 = vmatprep.mubr.f32.mxu0 0.0
        %975 = vmatmul.mubr.f32.gmra.mrb[0].mxu0 %v905
        %v976 = vpop.f32.mrb[0].mxu0
        %v977 = vadd.f32 0.0, %v976
        %v978 = vpop.f32.mrb[0].mxu0
        %979 = vmatprep.mubr.f32.mxu0 0.0
        %980 = vmatmul.mubr.f32.gmra.mrb[0].mxu0 %v908
        %v981 = vpop.f32.mrb[0].mxu0
        %v982 = vadd.f32 0.0, %v981
        %v983 = vpop.f32.mrb[0].mxu0
        %984 = vdwg.mxu0
        %985 = vrot.lane.b32.xlu0 %v577, 120
        %v986 = vpop.permute.xlu0 %985
        %987 = vrot.lane.b32.xlu0 %v582, 120
        %v988 = vpop.permute.xlu0 %987
        %989 = vrot.lane.b32.xlu0 %v681, 120
        %v990 = vpop.permute.xlu0 %989
        %991 = vrot.lane.b32.xlu0 %v686, 120
        %v992 = vpop.permute.xlu0 %991
        %v993 = vsel %vm791, %v986, 0
        %v995 = vsel %vm791, %v988, 0
        %v997 = vsel %vm791, %v990, 0
        %v999 = vsel %vm791, %v992, 0
        %1001 = vmatprep.subr.mxu0 0.0
        %1002 = vmatpush1.xpose.msra.mxu0 %v997
        %1003 = vmatprep.subr.mxu0 0.0
        %1004 = vmatpush1.xpose.msra.mxu0 %v999
        %1005 = vmatprep.subr.mxu0 0.0
        %1006 = vmatpush1.xpose.msra.mxu0 0.0
        %1007 = vmatprep.subr.mxu0 0.0
        %1008 = vmatpush1.xpose.msra.mxu0 0.0
        %1009 = vmatprep.subr.mxu0 0.0
        %1010 = vmatpush1.xpose.msra.mxu0 0.0
        %1011 = vmatprep.subr.mxu0 0.0
        %1012 = vmatpush1.xpose.msra.mxu0 0.0
        %1013 = vmatprep.subr.mxu0 0.0
        %1014 = vmatpush1.xpose.msra.mxu0 0.0
        %1015 = vmatprep.subr.mxu0 0.0
        %1016 = vmatpush1.xpose.msra.mxu0 0.0
        %1017 = vmatprep.subr.mxu0 0.0
        %1018 = vmatpush1.xpose.msra.mxu0 0.0
        %1019 = vmatprep.subr.mxu0 0.0
        %1020 = vmatpush1.xpose.msra.mxu0 0.0
        %1021 = vmatprep.subr.mxu0 0.0
        %1022 = vmatpush1.xpose.msra.mxu0 0.0
        %1023 = vmatprep.subr.mxu0 0.0
        %1024 = vmatpush1.xpose.msra.mxu0 0.0
        %1025 = vmatprep.subr.mxu0 0.0
        %1026 = vmatpush1.xpose.msra.mxu0 0.0
        %1027 = vmatprep.subr.mxu0 0.0
        %1028 = vmatpush1.xpose.msra.mxu0 0.0
        %1029 = vmatprep.subr.mxu0 0.0
        %1030 = vmatpush1.xpose.msra.mxu0 0.0
        %1031 = vmatprep.subr.mxu0 0.0
        %1032 = vmatpush1.xpose.msra.mxu0 0.0
        %1033 = vmatprep.subr.mxu0 0.0
        %1034 = vmatpush1.xpose.msra.mxu0 0.0
        %1035 = vmatprep.subr.mxu0 0.0
        %1036 = vmatpush1.xpose.msra.mxu0 0.0
        %1037 = vmatprep.subr.mxu0 0.0
        %1038 = vmatpush1.xpose.msra.mxu0 0.0
        %1039 = vmatprep.subr.mxu0 0.0
        %1040 = vmatpush1.xpose.msra.mxu0 0.0
        %1041 = vmatprep.subr.mxu0 0.0
        %1042 = vmatpush1.xpose.msra.mxu0 0.0
        %1043 = vmatprep.subr.mxu0 0.0
        %1044 = vmatpush1.xpose.msra.mxu0 0.0
        %1045 = vmatprep.subr.mxu0 0.0
        %1046 = vmatpush1.xpose.msra.mxu0 0.0
        %1047 = vmatprep.subr.mxu0 0.0
        %1048 = vmatpush1.xpose.msra.mxu0 0.0
        %1049 = vmatprep.subr.mxu0 0.0
        %1050 = vmatpush1.xpose.msra.mxu0 0.0
        %1051 = vmatprep.subr.mxu0 0.0
        %1052 = vmatpush1.xpose.msra.mxu0 0.0
        %1053 = vmatprep.subr.mxu0 0.0
        %1054 = vmatpush1.xpose.msra.mxu0 0.0
        %1055 = vmatprep.subr.mxu0 0.0
        %1056 = vmatpush1.xpose.msra.mxu0 0.0
        %1057 = vmatprep.subr.mxu0 0.0
        %1058 = vmatpush1.xpose.msra.mxu0 0.0
        %1059 = vmatprep.subr.mxu0 0.0
        %1060 = vmatpush1.xpose.msra.mxu0 0.0
        %1061 = vmatprep.subr.mxu0 0.0
        %1062 = vmatpush1.xpose.msra.mxu0 0.0
        %1063 = vmatprep.subr.mxu0 0.0
        %1064 = vmatpush1.xpose.msra.mxu0 0.0
        %1065 = vmatprep.mubr.f32.mxu0 0.0
        %1066 = vmatmul.mubr.f32.gmra.mrb[0].mxu0 %v993
        %v1067 = vpop.f32.mrb[0].mxu0
        %v1068 = vadd.f32 0.0, %v1067
        %v1069 = vpop.f32.mrb[0].mxu0
        %1070 = vmatprep.mubr.f32.mxu0 0.0
        %1071 = vmatmul.mubr.f32.gmra.mrb[0].mxu0 %v995
        %v1072 = vpop.f32.mrb[0].mxu0
        %v1073 = vadd.f32 0.0, %v1072
        %v1074 = vpop.f32.mrb[0].mxu0
        %1075 = vdwg.mxu0
        %v1076 = vmul.f32 %v1068, 0.35355338
        %v1077 = vmul.f32 %v1073, 0.35355338
        %v1078 = vsel %vm881, %v1076, -inf
        %1079 = vmax.xlane.f32.xlu0 %v1078
        %v1080 = vpop.xlane.xlu0 %1079
        %v1081 = vsel %vm881, %v1077, -inf
        %1082 = vmax.xlane.f32.xlu0 %v1081
        %v1083 = vpop.xlane.xlu0 %1082
        %v1084 = vsub.f32 %v1076, %v1080
        %v1085 = vsub.f32 %v1077, %v1083
        %v1086 = vmul.f32 %v1084, 1.442695
        %v1087 = vpow.pop %v1086
        %v1088 = vmul.f32 %v1085, 1.442695
        %v1089 = vpow.pop %v1088
        %v1090 = vsel %vm881, %v1087, 0.0
        %1091 = vadd.xlane.f32.xlu0 %v1090
        %v1092 = vpop.xlane.xlu0 %1091
        %v1093 = vsel %vm881, %v1089, 0.0
        %1094 = vadd.xlane.f32.xlu0 %v1093
        %v1095 = vpop.xlane.xlu0 %1094
        %v1096 = vrcp.pop %v1092
        %v1097 = vrcp.pop %v1095
        %v1098 = vmul.f32 %v1087, %v1096
        %v1099 = vmul.f32 %v1089, %v1097
        %1102 = vrot.lane.b32.xlu0 %v779, 120
        %v1103 = vpop.permute.xlu0 %1102
        %1104 = vrot.lane.b32.xlu0 %v784, 120
        %v1105 = vpop.permute.xlu0 %1104
        %v1109 = vsel %vm881, %v1098, 0
        %v1112 = vsel %vm881, %v1099, 0
        %1114 = vmatprep.subr.mxu0 0.0
        %1115 = vmatpush1.msra.mxu0 %v1103
        %1116 = vmatprep.subr.mxu0 0.0
        %1117 = vmatpush1.msra.mxu0 %v1105
        %1118 = vmatprep.subr.mxu0 0.0
        %1119 = vmatpush1.msra.mxu0 0.0
        %1120 = vmatprep.subr.mxu0 0.0
        %1121 = vmatpush1.msra.mxu0 0.0
        %1122 = vmatprep.subr.mxu0 0.0
        %1123 = vmatpush1.msra.mxu0 0.0
        %1124 = vmatprep.subr.mxu0 0.0
        %1125 = vmatpush1.msra.mxu0 0.0
        %1126 = vmatprep.subr.mxu0 0.0
        %1127 = vmatpush1.msra.mxu0 0.0
        %1128 = vmatprep.subr.mxu0 0.0
        %1129 = vmatpush1.msra.mxu0 0.0
        %1130 = vmatprep.subr.mxu0 0.0
        %1131 = vmatpush1.msra.mxu0 0.0
        %1132 = vmatprep.subr.mxu0 0.0
        %1133 = vmatpush1.msra.mxu0 0.0
        %1134 = vmatprep.subr.mxu0 0.0
        %1135 = vmatpush1.msra.mxu0 0.0
        %1136 = vmatprep.subr.mxu0 0.0
        %1137 = vmatpush1.msra.mxu0 0.0
        %1138 = vmatprep.subr.mxu0 0.0
        %1139 = vmatpush1.msra.mxu0 0.0
        %1140 = vmatprep.subr.mxu0 0.0
        %1141 = vmatpush1.msra.mxu0 0.0
        %1142 = vmatprep.subr.mxu0 0.0
        %1143 = vmatpush1.msra.mxu0 0.0
        %1144 = vmatprep.subr.mxu0 0.0
        %1145 = vmatpush1.msra.mxu0 0.0
        %1146 = vmatprep.subr.mxu0 0.0
        %1147 = vmatpush1.msra.mxu0 0.0
        %1148 = vmatprep.subr.mxu0 0.0
        %1149 = vmatpush1.msra.mxu0 0.0
        %1150 = vmatprep.subr.mxu0 0.0
        %1151 = vmatpush1.msra.mxu0 0.0
        %1152 = vmatprep.subr.mxu0 0.0
        %1153 = vmatpush1.msra.mxu0 0.0
        %1154 = vmatprep.subr.mxu0 0.0
        %1155 = vmatpush1.msra.mxu0 0.0
        %1156 = vmatprep.subr.mxu0 0.0
        %1157 = vmatpush1.msra.mxu0 0.0
        %1158 = vmatprep.subr.mxu0 0.0
        %1159 = vmatpush1.msra.mxu0 0.0
        %1160 = vmatprep.subr.mxu0 0.0
        %1161 = vmatpush1.msra.mxu0 0.0
        %1162 = vmatprep.subr.mxu0 0.0
        %1163 = vmatpush1.msra.mxu0 0.0
        %1164 = vmatprep.subr.mxu0 0.0
        %1165 = vmatpush1.msra.mxu0 0.0
        %1166 = vmatprep.subr.mxu0 0.0
        %1167 = vmatpush1.msra.mxu0 0.0
        %1168 = vmatprep.subr.mxu0 0.0
        %1169 = vmatpush1.msra.mxu0 0.0
        %1170 = vmatprep.subr.mxu0 0.0
        %1171 = vmatpush1.msra.mxu0 0.0
        %1172 = vmatprep.subr.mxu0 0.0
        %1173 = vmatpush1.msra.mxu0 0.0
        %1174 = vmatprep.subr.mxu0 0.0
        %1175 = vmatpush1.msra.mxu0 0.0
        %1176 = vmatprep.subr.mxu0 0.0
        %1177 = vmatpush1.msra.mxu0 0.0
        %1178 = vmatprep.mubr.f32.mxu0 0.0
        %1179 = vmatmul.mubr.f32.gmra.mrb[0].mxu0 %v1109
        %v1180 = vpop.f32.mrb[0].mxu0
        %v1181 = vadd.f32 0.0, %v1180
        %v1182 = vpop.f32.mrb[0].mxu0
        %1183 = vmatprep.mubr.f32.mxu0 0.0
        %1184 = vmatmul.mubr.f32.gmra.mrb[0].mxu0 %v1112
        %v1185 = vpop.f32.mrb[0].mxu0
        %v1186 = vadd.f32 0.0, %v1185
        %v1187 = vpop.f32.mrb[0].mxu0
        %1188 = vdwg.mxu0
        %1193 = vrot.lane.b32.xlu0 %v787, 120
        %v1194 = vpop.permute.xlu0 %1193
        %1195 = vrot.lane.b32.xlu0 %v788, 120
        %v1196 = vpop.permute.xlu0 %1195
        %1197 = vrot.lane.b32.xlu0 %v789, 120
        %v1198 = vpop.permute.xlu0 %1197
        %1199 = vrot.lane.b32.xlu0 %v790, 120
        %v1200 = vpop.permute.xlu0 %1199
        %v1202 = vsel %vm791, %v1181, 0
        %v1205 = vsel %vm791, %v1186, 0
        %v1207 = vsel %vm791, %v1194, 0
        %v1209 = vsel %vm791, %v1196, 0
        %v1211 = vsel %vm791, %v1198, 0
        %v1213 = vsel %vm791, %v1200, 0
        %1215 = vmatprep.subr.mxu0 0.0
        %1216 = vmatpush1.xpose.msra.mxu0 %v1207
        %1217 = vmatprep.subr.mxu0 0.0
        %1218 = vmatpush1.xpose.msra.mxu0 %v1209
        %1219 = vmatprep.subr.mxu0 0.0
        %1220 = vmatpush1.xpose.msra.mxu0 %v1211
        %1221 = vmatprep.subr.mxu0 0.0
        %1222 = vmatpush1.xpose.msra.mxu0 %v1213
        %1223 = vmatprep.subr.mxu0 0.0
        %1224 = vmatpush1.xpose.msra.mxu0 0.0
        %1225 = vmatprep.subr.mxu0 0.0
        %1226 = vmatpush1.xpose.msra.mxu0 0.0
        %1227 = vmatprep.subr.mxu0 0.0
        %1228 = vmatpush1.xpose.msra.mxu0 0.0
        %1229 = vmatprep.subr.mxu0 0.0
        %1230 = vmatpush1.xpose.msra.mxu0 0.0
        %1231 = vmatprep.subr.mxu0 0.0
        %1232 = vmatpush1.xpose.msra.mxu0 0.0
        %1233 = vmatprep.subr.mxu0 0.0
        %1234 = vmatpush1.xpose.msra.mxu0 0.0
        %1235 = vmatprep.subr.mxu0 0.0
        %1236 = vmatpush1.xpose.msra.mxu0 0.0
        %1237 = vmatprep.subr.mxu0 0.0
        %1238 = vmatpush1.xpose.msra.mxu0 0.0
        %1239 = vmatprep.subr.mxu0 0.0
        %1240 = vmatpush1.xpose.msra.mxu0 0.0
        %1241 = vmatprep.subr.mxu0 0.0
        %1242 = vmatpush1.xpose.msra.mxu0 0.0
        %1243 = vmatprep.subr.mxu0 0.0
        %1244 = vmatpush1.xpose.msra.mxu0 0.0
        %1245 = vmatprep.subr.mxu0 0.0
        %1246 = vmatpush1.xpose.msra.mxu0 0.0
        %1247 = vmatprep.subr.mxu0 0.0
        %1248 = vmatpush1.xpose.msra.mxu0 0.0
        %1249 = vmatprep.subr.mxu0 0.0
        %1250 = vmatpush1.xpose.msra.mxu0 0.0
        %1251 = vmatprep.subr.mxu0 0.0
        %1252 = vmatpush1.xpose.msra.mxu0 0.0
        %1253 = vmatprep.subr.mxu0 0.0
        %1254 = vmatpush1.xpose.msra.mxu0 0.0
        %1255 = vmatprep.subr.mxu0 0.0
        %1256 = vmatpush1.xpose.msra.mxu0 0.0
        %1257 = vmatprep.subr.mxu0 0.0
        %1258 = vmatpush1.xpose.msra.mxu0 0.0
        %1259 = vmatprep.subr.mxu0 0.0
        %1260 = vmatpush1.xpose.msra.mxu0 0.0
        %1261 = vmatprep.subr.mxu0 0.0
        %1262 = vmatpush1.xpose.msra.mxu0 0.0
        %1263 = vmatprep.subr.mxu0 0.0
        %1264 = vmatpush1.xpose.msra.mxu0 0.0
        %1265 = vmatprep.subr.mxu0 0.0
        %1266 = vmatpush1.xpose.msra.mxu0 0.0
        %1267 = vmatprep.subr.mxu0 0.0
        %1268 = vmatpush1.xpose.msra.mxu0 0.0
        %1269 = vmatprep.subr.mxu0 0.0
        %1270 = vmatpush1.xpose.msra.mxu0 0.0
        %1271 = vmatprep.subr.mxu0 0.0
        %1272 = vmatpush1.xpose.msra.mxu0 0.0
        %1273 = vmatprep.subr.mxu0 0.0
        %1274 = vmatpush1.xpose.msra.mxu0 0.0
        %1275 = vmatprep.subr.mxu0 0.0
        %1276 = vmatpush1.xpose.msra.mxu0 0.0
        %1277 = vmatprep.subr.mxu0 0.0
        %1278 = vmatpush1.xpose.msra.mxu0 0.0
        %1279 = vmatprep.mubr.f32.mxu0 0.0
        %1280 = vmatmul.mubr.f32.gmra.mrb[0].mxu0 %v1202
        %v1281 = vpop.f32.mrb[0].mxu0
        %v1282 = vadd.f32 0.0, %v1281
        %v1283 = vpop.f32.mrb[0].mxu0
        %1284 = vmatprep.mubr.f32.mxu0 0.0
        %1285 = vmatmul.mubr.f32.gmra.mrb[0].mxu0 %v1205
        %v1286 = vpop.f32.mrb[0].mxu0
        %v1287 = vadd.f32 0.0, %v1286
        %v1288 = vpop.f32.mrb[0].mxu0
        %1289 = vdwg.mxu0
        %v1291 = vsel %vm791, %v977, 0
        %v1294 = vsel %vm791, %v982, 0
        %v1296 = vsel %vm791, %v787, 0
        %v1298 = vsel %vm791, %v788, 0
        %v1300 = vsel %vm791, %v789, 0
        %v1302 = vsel %vm791, %v790, 0
        %1304 = vmatprep.subr.mxu0 0.0
        %1305 = vmatpush1.xpose.msra.mxu0 %v1296
        %1306 = vmatprep.subr.mxu0 0.0
        %1307 = vmatpush1.xpose.msra.mxu0 %v1298
        %1308 = vmatprep.subr.mxu0 0.0
        %1309 = vmatpush1.xpose.msra.mxu0 %v1300
        %1310 = vmatprep.subr.mxu0 0.0
        %1311 = vmatpush1.xpose.msra.mxu0 %v1302
        %1312 = vmatprep.subr.mxu0 0.0
        %1313 = vmatpush1.xpose.msra.mxu0 0.0
        %1314 = vmatprep.subr.mxu0 0.0
        %1315 = vmatpush1.xpose.msra.mxu0 0.0
        %1316 = vmatprep.subr.mxu0 0.0
        %1317 = vmatpush1.xpose.msra.mxu0 0.0
        %1318 = vmatprep.subr.mxu0 0.0
        %1319 = vmatpush1.xpose.msra.mxu0 0.0
        %1320 = vmatprep.subr.mxu0 0.0
        %1321 = vmatpush1.xpose.msra.mxu0 0.0
        %1322 = vmatprep.subr.mxu0 0.0
        %1323 = vmatpush1.xpose.msra.mxu0 0.0
        %1324 = vmatprep.subr.mxu0 0.0
        %1325 = vmatpush1.xpose.msra.mxu0 0.0
        %1326 = vmatprep.subr.mxu0 0.0
        %1327 = vmatpush1.xpose.msra.mxu0 0.0
        %1328 = vmatprep.subr.mxu0 0.0
        %1329 = vmatpush1.xpose.msra.mxu0 0.0
        %1330 = vmatprep.subr.mxu0 0.0
        %1331 = vmatpush1.xpose.msra.mxu0 0.0
        %1332 = vmatprep.subr.mxu0 0.0
        %1333 = vmatpush1.xpose.msra.mxu0 0.0
        %1334 = vmatprep.subr.mxu0 0.0
        %1335 = vmatpush1.xpose.msra.mxu0 0.0
        %1336 = vmatprep.subr.mxu0 0.0
        %1337 = vmatpush1.xpose.msra.mxu0 0.0
        %1338 = vmatprep.subr.mxu0 0.0
        %1339 = vmatpush1.xpose.msra.mxu0 0.0
        %1340 = vmatprep.subr.mxu0 0.0
        %1341 = vmatpush1.xpose.msra.mxu0 0.0
        %1342 = vmatprep.subr.mxu0 0.0
        %1343 = vmatpush1.xpose.msra.mxu0 0.0
        %1344 = vmatprep.subr.mxu0 0.0
        %1345 = vmatpush1.xpose.msra.mxu0 0.0
        %1346 = vmatprep.subr.mxu0 0.0
        %1347 = vmatpush1.xpose.msra.mxu0 0.0
        %1348 = vmatprep.subr.mxu0 0.0
        %1349 = vmatpush1.xpose.msra.mxu0 0.0
        %1350 = vmatprep.subr.mxu0 0.0
        %1351 = vmatpush1.xpose.msra.mxu0 0.0
        %1352 = vmatprep.subr.mxu0 0.0
        %1353 = vmatpush1.xpose.msra.mxu0 0.0
        %1354 = vmatprep.subr.mxu0 0.0
        %1355 = vmatpush1.xpose.msra.mxu0 0.0
        %1356 = vmatprep.subr.mxu0 0.0
        %1357 = vmatpush1.xpose.msra.mxu0 0.0
        %1358 = vmatprep.subr.mxu0 0.0
        %1359 = vmatpush1.xpose.msra.mxu0 0.0
        %1360 = vmatprep.subr.mxu0 0.0
        %1361 = vmatpush1.xpose.msra.mxu0 0.0
        %1362 = vmatprep.subr.mxu0 0.0
        %1363 = vmatpush1.xpose.msra.mxu0 0.0
        %1364 = vmatprep.subr.mxu0 0.0
        %1365 = vmatpush1.xpose.msra.mxu0 0.0
        %1366 = vmatprep.subr.mxu0 0.0
        %1367 = vmatpush1.xpose.msra.mxu0 0.0
        %1368 = vmatprep.mubr.f32.mxu0 0.0
        %1369 = vmatmul.mubr.f32.gmra.mrb[0].mxu0 %v1291
        %v1370 = vpop.f32.mrb[0].mxu0
        %v1371 = vadd.f32 %v1282, %v1370
        %v1372 = vpop.f32.mrb[0].mxu0
        %1373 = vmatprep.mubr.f32.mxu0 0.0
        %1374 = vmatmul.mubr.f32.gmra.mrb[0].mxu0 %v1294
        %v1375 = vpop.f32.mrb[0].mxu0
        %v1376 = vadd.f32 %v1287, %v1375
        %v1377 = vpop.f32.mrb[0].mxu0
        %1378 = vdwg.mxu0
        %1379 = vrot.lane.b32.xlu0 %v577, 112
        %v1380 = vpop.permute.xlu0 %1379
        %1381 = vrot.lane.b32.xlu0 %v582, 112
        %v1382 = vpop.permute.xlu0 %1381
        %1383 = vrot.lane.b32.xlu0 %v681, 112
        %v1384 = vpop.permute.xlu0 %1383
        %1385 = vrot.lane.b32.xlu0 %v686, 112
        %v1386 = vpop.permute.xlu0 %1385
        %v1387 = vsel %vm791, %v1380, 0
        %v1389 = vsel %vm791, %v1382, 0
        %v1391 = vsel %vm791, %v1384, 0
        %v1393 = vsel %vm791, %v1386, 0
        %1395 = vmatprep.subr.mxu0 0.0
        %1396 = vmatpush1.xpose.msra.mxu0 %v1391
        %1397 = vmatprep.subr.mxu0 0.0
        %1398 = vmatpush1.xpose.msra.mxu0 %v1393
        %1399 = vmatprep.subr.mxu0 0.0
        %1400 = vmatpush1.xpose.msra.mxu0 0.0
        %1401 = vmatprep.subr.mxu0 0.0
        %1402 = vmatpush1.xpose.msra.mxu0 0.0
        %1403 = vmatprep.subr.mxu0 0.0
        %1404 = vmatpush1.xpose.msra.mxu0 0.0
        %1405 = vmatprep.subr.mxu0 0.0
        %1406 = vmatpush1.xpose.msra.mxu0 0.0
        %1407 = vmatprep.subr.mxu0 0.0
        %1408 = vmatpush1.xpose.msra.mxu0 0.0
        %1409 = vmatprep.subr.mxu0 0.0
        %1410 = vmatpush1.xpose.msra.mxu0 0.0
        %1411 = vmatprep.subr.mxu0 0.0
        %1412 = vmatpush1.xpose.msra.mxu0 0.0
        %1413 = vmatprep.subr.mxu0 0.0
        %1414 = vmatpush1.xpose.msra.mxu0 0.0
        %1415 = vmatprep.subr.mxu0 0.0
        %1416 = vmatpush1.xpose.msra.mxu0 0.0
        %1417 = vmatprep.subr.mxu0 0.0
        %1418 = vmatpush1.xpose.msra.mxu0 0.0
        %1419 = vmatprep.subr.mxu0 0.0
        %1420 = vmatpush1.xpose.msra.mxu0 0.0
        %1421 = vmatprep.subr.mxu0 0.0
        %1422 = vmatpush1.xpose.msra.mxu0 0.0
        %1423 = vmatprep.subr.mxu0 0.0
        %1424 = vmatpush1.xpose.msra.mxu0 0.0
        %1425 = vmatprep.subr.mxu0 0.0
        %1426 = vmatpush1.xpose.msra.mxu0 0.0
        %1427 = vmatprep.subr.mxu0 0.0
        %1428 = vmatpush1.xpose.msra.mxu0 0.0
        %1429 = vmatprep.subr.mxu0 0.0
        %1430 = vmatpush1.xpose.msra.mxu0 0.0
        %1431 = vmatprep.subr.mxu0 0.0
        %1432 = vmatpush1.xpose.msra.mxu0 0.0
        %1433 = vmatprep.subr.mxu0 0.0
        %1434 = vmatpush1.xpose.msra.mxu0 0.0
        %1435 = vmatprep.subr.mxu0 0.0
        %1436 = vmatpush1.xpose.msra.mxu0 0.0
        %1437 = vmatprep.subr.mxu0 0.0
        %1438 = vmatpush1.xpose.msra.mxu0 0.0
        %1439 = vmatprep.subr.mxu0 0.0
        %1440 = vmatpush1.xpose.msra.mxu0 0.0
        %1441 = vmatprep.subr.mxu0 0.0
        %1442 = vmatpush1.xpose.msra.mxu0 0.0
        %1443 = vmatprep.subr.mxu0 0.0
        %1444 = vmatpush1.xpose.msra.mxu0 0.0
        %1445 = vmatprep.subr.mxu0 0.0
        %1446 = vmatpush1.xpose.msra.mxu0 0.0
        %1447 = vmatprep.subr.mxu0 0.0
        %1448 = vmatpush1.xpose.msra.mxu0 0.0
        %1449 = vmatprep.subr.mxu0 0.0
        %1450 = vmatpush1.xpose.msra.mxu0 0.0
        %1451 = vmatprep.subr.mxu0 0.0
        %1452 = vmatpush1.xpose.msra.mxu0 0.0
        %1453 = vmatprep.subr.mxu0 0.0
        %1454 = vmatpush1.xpose.msra.mxu0 0.0
        %1455 = vmatprep.subr.mxu0 0.0
        %1456 = vmatpush1.xpose.msra.mxu0 0.0
        %1457 = vmatprep.subr.mxu0 0.0
        %1458 = vmatpush1.xpose.msra.mxu0 0.0
        %1459 = vmatprep.mubr.f32.mxu0 0.0
        %1460 = vmatmul.mubr.f32.gmra.mrb[0].mxu0 %v1387
        %v1461 = vpop.f32.mrb[0].mxu0
        %v1462 = vadd.f32 0.0, %v1461
        %v1463 = vpop.f32.mrb[0].mxu0
        %1464 = vmatprep.mubr.f32.mxu0 0.0
        %1465 = vmatmul.mubr.f32.gmra.mrb[0].mxu0 %v1389
        %v1466 = vpop.f32.mrb[0].mxu0
        %v1467 = vadd.f32 0.0, %v1466
        %v1468 = vpop.f32.mrb[0].mxu0
        %1469 = vdwg.mxu0
        %v1470 = vmul.f32 %v1462, 0.35355338
        %v1471 = vmul.f32 %v1467, 0.35355338
        %v1472 = vsel %vm881, %v1470, -inf
        %1473 = vmax.xlane.f32.xlu0 %v1472
        %v1474 = vpop.xlane.xlu0 %1473
        %v1475 = vsel %vm881, %v1471, -inf
        %1476 = vmax.xlane.f32.xlu0 %v1475
        %v1477 = vpop.xlane.xlu0 %1476
        %v1478 = vsub.f32 %v1470, %v1474
        %v1479 = vsub.f32 %v1471, %v1477
        %v1480 = vmul.f32 %v1478, 1.442695
        %v1481 = vpow.pop %v1480
        %v1482 = vmul.f32 %v1479, 1.442695
        %v1483 = vpow.pop %v1482
        %v1484 = vsel %vm881, %v1481, 0.0
        %1485 = vadd.xlane.f32.xlu0 %v1484
        %v1486 = vpop.xlane.xlu0 %1485
        %v1487 = vsel %vm881, %v1483, 0.0
        %1488 = vadd.xlane.f32.xlu0 %v1487
        %v1489 = vpop.xlane.xlu0 %1488
        %v1490 = vrcp.pop %v1486
        %v1491 = vrcp.pop %v1489
        %v1492 = vmul.f32 %v1481, %v1490
        %v1493 = vmul.f32 %v1483, %v1491
        %1494 = vrot.lane.b32.xlu0 %v779, 112
        %v1495 = vpop.permute.xlu0 %1494
        %1496 = vrot.lane.b32.xlu0 %v784, 112
        %v1497 = vpop.permute.xlu0 %1496
        %v1501 = vsel %vm881, %v1492, 0
        %v1504 = vsel %vm881, %v1493, 0
        %1506 = vmatprep.subr.mxu0 0.0
        %1507 = vmatpush1.msra.mxu0 %v1495
        %1508 = vmatprep.subr.mxu0 0.0
        %1509 = vmatpush1.msra.mxu0 %v1497
        %1510 = vmatprep.subr.mxu0 0.0
        %1511 = vmatpush1.msra.mxu0 0.0
        %1512 = vmatprep.subr.mxu0 0.0
        %1513 = vmatpush1.msra.mxu0 0.0
        %1514 = vmatprep.subr.mxu0 0.0
        %1515 = vmatpush1.msra.mxu0 0.0
        %1516 = vmatprep.subr.mxu0 0.0
        %1517 = vmatpush1.msra.mxu0 0.0
        %1518 = vmatprep.subr.mxu0 0.0
        %1519 = vmatpush1.msra.mxu0 0.0
        %1520 = vmatprep.subr.mxu0 0.0
        %1521 = vmatpush1.msra.mxu0 0.0
        %1522 = vmatprep.subr.mxu0 0.0
        %1523 = vmatpush1.msra.mxu0 0.0
        %1524 = vmatprep.subr.mxu0 0.0
        %1525 = vmatpush1.msra.mxu0 0.0
        %1526 = vmatprep.subr.mxu0 0.0
        %1527 = vmatpush1.msra.mxu0 0.0
        %1528 = vmatprep.subr.mxu0 0.0
        %1529 = vmatpush1.msra.mxu0 0.0
        %1530 = vmatprep.subr.mxu0 0.0
        %1531 = vmatpush1.msra.mxu0 0.0
        %1532 = vmatprep.subr.mxu0 0.0
        %1533 = vmatpush1.msra.mxu0 0.0
        %1534 = vmatprep.subr.mxu0 0.0
        %1535 = vmatpush1.msra.mxu0 0.0
        %1536 = vmatprep.subr.mxu0 0.0
        %1537 = vmatpush1.msra.mxu0 0.0
        %1538 = vmatprep.subr.mxu0 0.0
        %1539 = vmatpush1.msra.mxu0 0.0
        %1540 = vmatprep.subr.mxu0 0.0
        %1541 = vmatpush1.msra.mxu0 0.0
        %1542 = vmatprep.subr.mxu0 0.0
        %1543 = vmatpush1.msra.mxu0 0.0
        %1544 = vmatprep.subr.mxu0 0.0
        %1545 = vmatpush1.msra.mxu0 0.0
        %1546 = vmatprep.subr.mxu0 0.0
        %1547 = vmatpush1.msra.mxu0 0.0
        %1548 = vmatprep.subr.mxu0 0.0
        %1549 = vmatpush1.msra.mxu0 0.0
        %1550 = vmatprep.subr.mxu0 0.0
        %1551 = vmatpush1.msra.mxu0 0.0
        %1552 = vmatprep.subr.mxu0 0.0
        %1553 = vmatpush1.msra.mxu0 0.0
        %1554 = vmatprep.subr.mxu0 0.0
        %1555 = vmatpush1.msra.mxu0 0.0
        %1556 = vmatprep.subr.mxu0 0.0
        %1557 = vmatpush1.msra.mxu0 0.0
        %1558 = vmatprep.subr.mxu0 0.0
        %1559 = vmatpush1.msra.mxu0 0.0
        %1560 = vmatprep.subr.mxu0 0.0
        %1561 = vmatpush1.msra.mxu0 0.0
        %1562 = vmatprep.subr.mxu0 0.0
        %1563 = vmatpush1.msra.mxu0 0.0
        %1564 = vmatprep.subr.mxu0 0.0
        %1565 = vmatpush1.msra.mxu0 0.0
        %1566 = vmatprep.subr.mxu0 0.0
        %1567 = vmatpush1.msra.mxu0 0.0
        %1568 = vmatprep.subr.mxu0 0.0
        %1569 = vmatpush1.msra.mxu0 0.0
        %1570 = vmatprep.mubr.f32.mxu0 0.0
        %1571 = vmatmul.mubr.f32.gmra.mrb[0].mxu0 %v1501
        %v1572 = vpop.f32.mrb[0].mxu0
        %v1573 = vadd.f32 0.0, %v1572
        %v1574 = vpop.f32.mrb[0].mxu0
        %1575 = vmatprep.mubr.f32.mxu0 0.0
        %1576 = vmatmul.mubr.f32.gmra.mrb[0].mxu0 %v1504
        %v1577 = vpop.f32.mrb[0].mxu0
        %v1578 = vadd.f32 0.0, %v1577
        %v1579 = vpop.f32.mrb[0].mxu0
        %1580 = vdwg.mxu0
        %1581 = vrot.lane.b32.xlu0 %v787, 112
        %v1582 = vpop.permute.xlu0 %1581
        %1583 = vrot.lane.b32.xlu0 %v788, 112
        %v1584 = vpop.permute.xlu0 %1583
        %1585 = vrot.lane.b32.xlu0 %v789, 112
        %v1586 = vpop.permute.xlu0 %1585
        %1587 = vrot.lane.b32.xlu0 %v790, 112
        %v1588 = vpop.permute.xlu0 %1587
        %v1590 = vsel %vm791, %v1573, 0
        %v1593 = vsel %vm791, %v1578, 0
        %v1595 = vsel %vm791, %v1582, 0
        %v1597 = vsel %vm791, %v1584, 0
        %v1599 = vsel %vm791, %v1586, 0
        %v1601 = vsel %vm791, %v1588, 0
        %1603 = vmatprep.subr.mxu0 0.0
        %1604 = vmatpush1.xpose.msra.mxu0 %v1595
        %1605 = vmatprep.subr.mxu0 0.0
        %1606 = vmatpush1.xpose.msra.mxu0 %v1597
        %1607 = vmatprep.subr.mxu0 0.0
        %1608 = vmatpush1.xpose.msra.mxu0 %v1599
        %1609 = vmatprep.subr.mxu0 0.0
        %1610 = vmatpush1.xpose.msra.mxu0 %v1601
        %1611 = vmatprep.subr.mxu0 0.0
        %1612 = vmatpush1.xpose.msra.mxu0 0.0
        %1613 = vmatprep.subr.mxu0 0.0
        %1614 = vmatpush1.xpose.msra.mxu0 0.0
        %1615 = vmatprep.subr.mxu0 0.0
        %1616 = vmatpush1.xpose.msra.mxu0 0.0
        %1617 = vmatprep.subr.mxu0 0.0
        %1618 = vmatpush1.xpose.msra.mxu0 0.0
        %1619 = vmatprep.subr.mxu0 0.0
        %1620 = vmatpush1.xpose.msra.mxu0 0.0
        %1621 = vmatprep.subr.mxu0 0.0
        %1622 = vmatpush1.xpose.msra.mxu0 0.0
        %1623 = vmatprep.subr.mxu0 0.0
        %1624 = vmatpush1.xpose.msra.mxu0 0.0
        %1625 = vmatprep.subr.mxu0 0.0
        %1626 = vmatpush1.xpose.msra.mxu0 0.0
        %1627 = vmatprep.subr.mxu0 0.0
        %1628 = vmatpush1.xpose.msra.mxu0 0.0
        %1629 = vmatprep.subr.mxu0 0.0
        %1630 = vmatpush1.xpose.msra.mxu0 0.0
        %1631 = vmatprep.subr.mxu0 0.0
        %1632 = vmatpush1.xpose.msra.mxu0 0.0
        %1633 = vmatprep.subr.mxu0 0.0
        %1634 = vmatpush1.xpose.msra.mxu0 0.0
        %1635 = vmatprep.subr.mxu0 0.0
        %1636 = vmatpush1.xpose.msra.mxu0 0.0
        %1637 = vmatprep.subr.mxu0 0.0
        %1638 = vmatpush1.xpose.msra.mxu0 0.0
        %1639 = vmatprep.subr.mxu0 0.0
        %1640 = vmatpush1.xpose.msra.mxu0 0.0
        %1641 = vmatprep.subr.mxu0 0.0
        %1642 = vmatpush1.xpose.msra.mxu0 0.0
        %1643 = vmatprep.subr.mxu0 0.0
        %1644 = vmatpush1.xpose.msra.mxu0 0.0
        %1645 = vmatprep.subr.mxu0 0.0
        %1646 = vmatpush1.xpose.msra.mxu0 0.0
        %1647 = vmatprep.subr.mxu0 0.0
        %1648 = vmatpush1.xpose.msra.mxu0 0.0
        %1649 = vmatprep.subr.mxu0 0.0
        %1650 = vmatpush1.xpose.msra.mxu0 0.0
        %1651 = vmatprep.subr.mxu0 0.0
        %1652 = vmatpush1.xpose.msra.mxu0 0.0
        %1653 = vmatprep.subr.mxu0 0.0
        %1654 = vmatpush1.xpose.msra.mxu0 0.0
        %1655 = vmatprep.subr.mxu0 0.0
        %1656 = vmatpush1.xpose.msra.mxu0 0.0
        %1657 = vmatprep.subr.mxu0 0.0
        %1658 = vmatpush1.xpose.msra.mxu0 0.0
        %1659 = vmatprep.subr.mxu0 0.0
        %1660 = vmatpush1.xpose.msra.mxu0 0.0
        %1661 = vmatprep.subr.mxu0 0.0
        %1662 = vmatpush1.xpose.msra.mxu0 0.0
        %1663 = vmatprep.subr.mxu0 0.0
        %1664 = vmatpush1.xpose.msra.mxu0 0.0
        %1665 = vmatprep.subr.mxu0 0.0
        %1666 = vmatpush1.xpose.msra.mxu0 0.0
        %1667 = vmatprep.mubr.f32.mxu0 0.0
        %1668 = vmatmul.mubr.f32.gmra.mrb[0].mxu0 %v1590
        %v1669 = vpop.f32.mrb[0].mxu0
        %v1670 = vadd.f32 0.0, %v1669
        %v1671 = vpop.f32.mrb[0].mxu0
        %1672 = vmatprep.mubr.f32.mxu0 0.0
        %1673 = vmatmul.mubr.f32.gmra.mrb[0].mxu0 %v1593
        %v1674 = vpop.f32.mrb[0].mxu0
        %v1675 = vadd.f32 0.0, %v1674
        %v1676 = vpop.f32.mrb[0].mxu0
        %1677 = vdwg.mxu0
        %v1678 = vadd.f32 %v1371, %v1670
        %v1679 = vadd.f32 %v1376, %v1675
        %1680 = vrot.lane.b32.xlu0 %v577, 104
        %v1681 = vpop.permute.xlu0 %1680
        %1682 = vrot.lane.b32.xlu0 %v582, 104
        %v1683 = vpop.permute.xlu0 %1682
        %1684 = vrot.lane.b32.xlu0 %v681, 104
        %v1685 = vpop.permute.xlu0 %1684
        %1686 = vrot.lane.b32.xlu0 %v686, 104
        %v1687 = vpop.permute.xlu0 %1686
        %v1688 = vsel %vm791, %v1681, 0
        %v1690 = vsel %vm791, %v1683, 0
        %v1692 = vsel %vm791, %v1685, 0
        %v1694 = vsel %vm791, %v1687, 0
        %1696 = vmatprep.subr.mxu0 0.0
        %1697 = vmatpush1.xpose.msra.mxu0 %v1692
        %1698 = vmatprep.subr.mxu0 0.0
        %1699 = vmatpush1.xpose.msra.mxu0 %v1694
        %1700 = vmatprep.subr.mxu0 0.0
        %1701 = vmatpush1.xpose.msra.mxu0 0.0
        %1702 = vmatprep.subr.mxu0 0.0
        %1703 = vmatpush1.xpose.msra.mxu0 0.0
        %1704 = vmatprep.subr.mxu0 0.0
        %1705 = vmatpush1.xpose.msra.mxu0 0.0
        %1706 = vmatprep.subr.mxu0 0.0
        %1707 = vmatpush1.xpose.msra.mxu0 0.0
        %1708 = vmatprep.subr.mxu0 0.0
        %1709 = vmatpush1.xpose.msra.mxu0 0.0
        %1710 = vmatprep.subr.mxu0 0.0
        %1711 = vmatpush1.xpose.msra.mxu0 0.0
        %1712 = vmatprep.subr.mxu0 0.0
        %1713 = vmatpush1.xpose.msra.mxu0 0.0
        %1714 = vmatprep.subr.mxu0 0.0
        %1715 = vmatpush1.xpose.msra.mxu0 0.0
        %1716 = vmatprep.subr.mxu0 0.0
        %1717 = vmatpush1.xpose.msra.mxu0 0.0
        %1718 = vmatprep.subr.mxu0 0.0
        %1719 = vmatpush1.xpose.msra.mxu0 0.0
        %1720 = vmatprep.subr.mxu0 0.0
        %1721 = vmatpush1.xpose.msra.mxu0 0.0
        %1722 = vmatprep.subr.mxu0 0.0
        %1723 = vmatpush1.xpose.msra.mxu0 0.0
        %1724 = vmatprep.subr.mxu0 0.0
        %1725 = vmatpush1.xpose.msra.mxu0 0.0
        %1726 = vmatprep.subr.mxu0 0.0
        %1727 = vmatpush1.xpose.msra.mxu0 0.0
        %1728 = vmatprep.subr.mxu0 0.0
        %1729 = vmatpush1.xpose.msra.mxu0 0.0
        %1730 = vmatprep.subr.mxu0 0.0
        %1731 = vmatpush1.xpose.msra.mxu0 0.0
        %1732 = vmatprep.subr.mxu0 0.0
        %1733 = vmatpush1.xpose.msra.mxu0 0.0
        %1734 = vmatprep.subr.mxu0 0.0
        %1735 = vmatpush1.xpose.msra.mxu0 0.0
        %1736 = vmatprep.subr.mxu0 0.0
        %1737 = vmatpush1.xpose.msra.mxu0 0.0
        %1738 = vmatprep.subr.mxu0 0.0
        %1739 = vmatpush1.xpose.msra.mxu0 0.0
        %1740 = vmatprep.subr.mxu0 0.0
        %1741 = vmatpush1.xpose.msra.mxu0 0.0
        %1742 = vmatprep.subr.mxu0 0.0
        %1743 = vmatpush1.xpose.msra.mxu0 0.0
        %1744 = vmatprep.subr.mxu0 0.0
        %1745 = vmatpush1.xpose.msra.mxu0 0.0
        %1746 = vmatprep.subr.mxu0 0.0
        %1747 = vmatpush1.xpose.msra.mxu0 0.0
        %1748 = vmatprep.subr.mxu0 0.0
        %1749 = vmatpush1.xpose.msra.mxu0 0.0
        %1750 = vmatprep.subr.mxu0 0.0
        %1751 = vmatpush1.xpose.msra.mxu0 0.0
        %1752 = vmatprep.subr.mxu0 0.0
        %1753 = vmatpush1.xpose.msra.mxu0 0.0
        %1754 = vmatprep.subr.mxu0 0.0
        %1755 = vmatpush1.xpose.msra.mxu0 0.0
        %1756 = vmatprep.subr.mxu0 0.0
        %1757 = vmatpush1.xpose.msra.mxu0 0.0
        %1758 = vmatprep.subr.mxu0 0.0
        %1759 = vmatpush1.xpose.msra.mxu0 0.0
        %1760 = vmatprep.mubr.f32.mxu0 0.0
        %1761 = vmatmul.mubr.f32.gmra.mrb[0].mxu0 %v1688
        %v1762 = vpop.f32.mrb[0].mxu0
        %v1763 = vadd.f32 0.0, %v1762
        %v1764 = vpop.f32.mrb[0].mxu0
        %1765 = vmatprep.mubr.f32.mxu0 0.0
        %1766 = vmatmul.mubr.f32.gmra.mrb[0].mxu0 %v1690
        %v1767 = vpop.f32.mrb[0].mxu0
        %v1768 = vadd.f32 0.0, %v1767
        %v1769 = vpop.f32.mrb[0].mxu0
        %1770 = vdwg.mxu0
        %v1771 = vmul.f32 %v1763, 0.35355338
        %v1772 = vmul.f32 %v1768, 0.35355338
        %v1773 = vsel %vm881, %v1771, -inf
        %1774 = vmax.xlane.f32.xlu0 %v1773
        %v1775 = vpop.xlane.xlu0 %1774
        %v1776 = vsel %vm881, %v1772, -inf
        %1777 = vmax.xlane.f32.xlu0 %v1776
        %v1778 = vpop.xlane.xlu0 %1777
        %v1779 = vsub.f32 %v1771, %v1775
        %v1780 = vsub.f32 %v1772, %v1778
        %v1781 = vmul.f32 %v1779, 1.442695
        %v1782 = vpow.pop %v1781
        %v1783 = vmul.f32 %v1780, 1.442695
        %v1784 = vpow.pop %v1783
        %v1785 = vsel %vm881, %v1782, 0.0
        %1786 = vadd.xlane.f32.xlu0 %v1785
        %v1787 = vpop.xlane.xlu0 %1786
        %v1788 = vsel %vm881, %v1784, 0.0
        %1789 = vadd.xlane.f32.xlu0 %v1788
        %v1790 = vpop.xlane.xlu0 %1789
        %v1791 = vrcp.pop %v1787
        %v1792 = vrcp.pop %v1790
        %v1793 = vmul.f32 %v1782, %v1791
        %v1794 = vmul.f32 %v1784, %v1792
        %1795 = vrot.lane.b32.xlu0 %v779, 104
        %v1796 = vpop.permute.xlu0 %1795
        %1797 = vrot.lane.b32.xlu0 %v784, 104
        %v1798 = vpop.permute.xlu0 %1797
        %v1802 = vsel %vm881, %v1793, 0
        %v1805 = vsel %vm881, %v1794, 0
        %1807 = vmatprep.subr.mxu0 0.0
        %1808 = vmatpush1.msra.mxu0 %v1796
        %1809 = vmatprep.subr.mxu0 0.0
        %1810 = vmatpush1.msra.mxu0 %v1798
        %1811 = vmatprep.subr.mxu0 0.0
        %1812 = vmatpush1.msra.mxu0 0.0
        %1813 = vmatprep.subr.mxu0 0.0
        %1814 = vmatpush1.msra.mxu0 0.0
        %1815 = vmatprep.subr.mxu0 0.0
        %1816 = vmatpush1.msra.mxu0 0.0
        %1817 = vmatprep.subr.mxu0 0.0
        %1818 = vmatpush1.msra.mxu0 0.0
        %1819 = vmatprep.subr.mxu0 0.0
        %1820 = vmatpush1.msra.mxu0 0.0
        %1821 = vmatprep.subr.mxu0 0.0
        %1822 = vmatpush1.msra.mxu0 0.0
        %1823 = vmatprep.subr.mxu0 0.0
        %1824 = vmatpush1.msra.mxu0 0.0
        %1825 = vmatprep.subr.mxu0 0.0
        %1826 = vmatpush1.msra.mxu0 0.0
        %1827 = vmatprep.subr.mxu0 0.0
        %1828 = vmatpush1.msra.mxu0 0.0
        %1829 = vmatprep.subr.mxu0 0.0
        %1830 = vmatpush1.msra.mxu0 0.0
        %1831 = vmatprep.subr.mxu0 0.0
        %1832 = vmatpush1.msra.mxu0 0.0
        %1833 = vmatprep.subr.mxu0 0.0
        %1834 = vmatpush1.msra.mxu0 0.0
        %1835 = vmatprep.subr.mxu0 0.0
        %1836 = vmatpush1.msra.mxu0 0.0
        %1837 = vmatprep.subr.mxu0 0.0
        %1838 = vmatpush1.msra.mxu0 0.0
        %1839 = vmatprep.subr.mxu0 0.0
        %1840 = vmatpush1.msra.mxu0 0.0
        %1841 = vmatprep.subr.mxu0 0.0
        %1842 = vmatpush1.msra.mxu0 0.0
        %1843 = vmatprep.subr.mxu0 0.0
        %1844 = vmatpush1.msra.mxu0 0.0
        %1845 = vmatprep.subr.mxu0 0.0
        %1846 = vmatpush1.msra.mxu0 0.0
        %1847 = vmatprep.subr.mxu0 0.0
        %1848 = vmatpush1.msra.mxu0 0.0
        %1849 = vmatprep.subr.mxu0 0.0
        %1850 = vmatpush1.msra.mxu0 0.0
        %1851 = vmatprep.subr.mxu0 0.0
        %1852 = vmatpush1.msra.mxu0 0.0
        %1853 = vmatprep.subr.mxu0 0.0
        %1854 = vmatpush1.msra.mxu0 0.0
        %1855 = vmatprep.subr.mxu0 0.0
        %1856 = vmatpush1.msra.mxu0 0.0
        %1857 = vmatprep.subr.mxu0 0.0
        %1858 = vmatpush1.msra.mxu0 0.0
        %1859 = vmatprep.subr.mxu0 0.0
        %1860 = vmatpush1.msra.mxu0 0.0
        %1861 = vmatprep.subr.mxu0 0.0
        %1862 = vmatpush1.msra.mxu0 0.0
        %1863 = vmatprep.subr.mxu0 0.0
        %1864 = vmatpush1.msra.mxu0 0.0
        %1865 = vmatprep.subr.mxu0 0.0
        %1866 = vmatpush1.msra.mxu0 0.0
        %1867 = vmatprep.subr.mxu0 0.0
        %1868 = vmatpush1.msra.mxu0 0.0
        %1869 = vmatprep.subr.mxu0 0.0
        %1870 = vmatpush1.msra.mxu0 0.0
        %1871 = vmatprep.mubr.f32.mxu0 0.0
        %1872 = vmatmul.mubr.f32.gmra.mrb[0].mxu0 %v1802
        %v1873 = vpop.f32.mrb[0].mxu0
        %v1874 = vadd.f32 0.0, %v1873
        %v1875 = vpop.f32.mrb[0].mxu0
        %1876 = vmatprep.mubr.f32.mxu0 0.0
        %1877 = vmatmul.mubr.f32.gmra.mrb[0].mxu0 %v1805
        %v1878 = vpop.f32.mrb[0].mxu0
        %v1879 = vadd.f32 0.0, %v1878
        %v1880 = vpop.f32.mrb[0].mxu0
        %1881 = vdwg.mxu0
        %1882 = vrot.lane.b32.xlu0 %v787, 104
        %v1883 = vpop.permute.xlu0 %1882
        %1884 = vrot.lane.b32.xlu0 %v788, 104
        %v1885 = vpop.permute.xlu0 %1884
        %1886 = vrot.lane.b32.xlu0 %v789, 104
        %v1887 = vpop.permute.xlu0 %1886
        %1888 = vrot.lane.b32.xlu0 %v790, 104
        %v1889 = vpop.permute.xlu0 %1888
        %v1891 = vsel %vm791, %v1874, 0
        %v1894 = vsel %vm791, %v1879, 0
        %v1896 = vsel %vm791, %v1883, 0
        %v1898 = vsel %vm791, %v1885, 0
        %v1900 = vsel %vm791, %v1887, 0
        %v1902 = vsel %vm791, %v1889, 0
        %1904 = vmatprep.subr.mxu0 0.0
        %1905 = vmatpush1.xpose.msra.mxu0 %v1896
        %1906 = vmatprep.subr.mxu0 0.0
        %1907 = vmatpush1.xpose.msra.mxu0 %v1898
        %1908 = vmatprep.subr.mxu0 0.0
        %1909 = vmatpush1.xpose.msra.mxu0 %v1900
        %1910 = vmatprep.subr.mxu0 0.0
        %1911 = vmatpush1.xpose.msra.mxu0 %v1902
        %1912 = vmatprep.subr.mxu0 0.0
        %1913 = vmatpush1.xpose.msra.mxu0 0.0
        %1914 = vmatprep.subr.mxu0 0.0
        %1915 = vmatpush1.xpose.msra.mxu0 0.0
        %1916 = vmatprep.subr.mxu0 0.0
        %1917 = vmatpush1.xpose.msra.mxu0 0.0
        %1918 = vmatprep.subr.mxu0 0.0
        %1919 = vmatpush1.xpose.msra.mxu0 0.0
        %1920 = vmatprep.subr.mxu0 0.0
        %1921 = vmatpush1.xpose.msra.mxu0 0.0
        %1922 = vmatprep.subr.mxu0 0.0
        %1923 = vmatpush1.xpose.msra.mxu0 0.0
        %1924 = vmatprep.subr.mxu0 0.0
        %1925 = vmatpush1.xpose.msra.mxu0 0.0
        %1926 = vmatprep.subr.mxu0 0.0
        %1927 = vmatpush1.xpose.msra.mxu0 0.0
        %1928 = vmatprep.subr.mxu0 0.0
        %1929 = vmatpush1.xpose.msra.mxu0 0.0
        %1930 = vmatprep.subr.mxu0 0.0
        %1931 = vmatpush1.xpose.msra.mxu0 0.0
        %1932 = vmatprep.subr.mxu0 0.0
        %1933 = vmatpush1.xpose.msra.mxu0 0.0
        %1934 = vmatprep.subr.mxu0 0.0
        %1935 = vmatpush1.xpose.msra.mxu0 0.0
        %1936 = vmatprep.subr.mxu0 0.0
        %1937 = vmatpush1.xpose.msra.mxu0 0.0
        %1938 = vmatprep.subr.mxu0 0.0
        %1939 = vmatpush1.xpose.msra.mxu0 0.0
        %1940 = vmatprep.subr.mxu0 0.0
        %1941 = vmatpush1.xpose.msra.mxu0 0.0
        %1942 = vmatprep.subr.mxu0 0.0
        %1943 = vmatpush1.xpose.msra.mxu0 0.0
        %1944 = vmatprep.subr.mxu0 0.0
        %1945 = vmatpush1.xpose.msra.mxu0 0.0
        %1946 = vmatprep.subr.mxu0 0.0
        %1947 = vmatpush1.xpose.msra.mxu0 0.0
        %1948 = vmatprep.subr.mxu0 0.0
        %1949 = vmatpush1.xpose.msra.mxu0 0.0
        %1950 = vmatprep.subr.mxu0 0.0
        %1951 = vmatpush1.xpose.msra.mxu0 0.0
        %1952 = vmatprep.subr.mxu0 0.0
        %1953 = vmatpush1.xpose.msra.mxu0 0.0
        %1954 = vmatprep.subr.mxu0 0.0
        %1955 = vmatpush1.xpose.msra.mxu0 0.0
        %1956 = vmatprep.subr.mxu0 0.0
        %1957 = vmatpush1.xpose.msra.mxu0 0.0
        %1958 = vmatprep.subr.mxu0 0.0
        %1959 = vmatpush1.xpose.msra.mxu0 0.0
        %1960 = vmatprep.subr.mxu0 0.0
        %1961 = vmatpush1.xpose.msra.mxu0 0.0
        %1962 = vmatprep.subr.mxu0 0.0
        %1963 = vmatpush1.xpose.msra.mxu0 0.0
        %1964 = vmatprep.subr.mxu0 0.0
        %1965 = vmatpush1.xpose.msra.mxu0 0.0
        %1966 = vmatprep.subr.mxu0 0.0
        %1967 = vmatpush1.xpose.msra.mxu0 0.0
        %1968 = vmatprep.mubr.f32.mxu0 0.0
        %1969 = vmatmul.mubr.f32.gmra.mrb[0].mxu0 %v1891
        %v1970 = vpop.f32.mrb[0].mxu0
        %v1971 = vadd.f32 0.0, %v1970
        %v1972 = vpop.f32.mrb[0].mxu0
        %1973 = vmatprep.mubr.f32.mxu0 0.0
        %1974 = vmatmul.mubr.f32.gmra.mrb[0].mxu0 %v1894
        %v1975 = vpop.f32.mrb[0].mxu0
        %v1976 = vadd.f32 0.0, %v1975
        %v1977 = vpop.f32.mrb[0].mxu0
        %1978 = vdwg.mxu0
        %v1979 = vadd.f32 %v1678, %v1971
        %v1980 = vadd.f32 %v1679, %v1976
        %v1981 = vld [vmem:[%s9] sm:$0x1]
        %v1983 = vlaneseq
        %v1984 = vshrl.u32 %v1983, 7
        %v1985 = vsub.s32 0, %v1984
        %v1986 = vrot.slane %v1981, %v1985
        %v1988 = vadd.f32 %v1979, %v1986
        %v1989 = vadd.f32 %v1980, %v1986
        %1990 = vst.msk [vmem:[%s475] sm:$0xff] %vm491, %v1988
        %1991 = vst.msk [vmem:[%s475 + $0x8] sm:$0xff] %vm491, %v1989
        %s1992 = sand.u32 %s260, 1
        %s1993 = scalar_lea.sflag [#allocation4], %s1992
        %s1994 = sand.u32 %s260, 1
        %s1995 = smul.addr %s1994, 16
        %s1996 = scalar_lea.vmem [#allocation13], %s1995
        // Predicated region
        $region85: #{tpu_custom_call.1} parent=59 // pred_check
          %p1997 = pneg %p270
        $region86: #{tpu_custom_call.1} parent=59 // pred_check_branch
          %1999 = sbr.rel (%p1997) target = $region88
        $region87: #{tpu_custom_call.1} parent=59 // pred_region
          %s2001 = ssub.s32 256, 256
          %2002 = vsyncadd %s1993, %s2001
          %s2003 = smul.addr %s32, 2
          %s2004 = smul.addr %s2003, 128
          %s2005 = scalar_lea.hbm %s10, %s2004
          %s2006 = sshll.u32 %s1996, 4
          %s2007 = int_to_ptr.vmem [resolvable:$true] %s2006
          %2012 = dma.vmem_to_hbm [thread:$0]  %s2007, 256, %s2005, %s1993, 128, 128, 8
        $region88: #{tpu_custom_call.1} parent=59 // pred_fallthru
          _
      $region60: #{tpu_custom_call.1} parent=5 // pred_fallthru
        _
      %p2013 = scmp.le.s32.totalorder 2, %s27
      // Predicated region
      $region89: #{tpu_custom_call.1} parent=5 // pred_check
        %p2014 = pneg %p2013
      $region90: #{tpu_custom_call.1} parent=5 // pred_check_branch
        %2016 = sbr.rel (%p2014) target = $region92
      $region91: #{tpu_custom_call.1} parent=5 // pred_region
        %s2017 = ssub.s32 %s27, 2
        // Predicated region
        $region93: #{tpu_custom_call.1} parent=91 // pred_check
          %p2018 = pneg %p276
        $region94: #{tpu_custom_call.1} parent=91 // pred_check_branch
          %2020 = sbr.rel (%p2018) target = $region96
        $region95: #{tpu_custom_call.1} parent=91 // pred_region
          %s2021 = sand.u32 %s261, 1
          %s2022 = scalar_lea.sflag [#allocation4], %s2021
          %s2023 = sand.u32 %s261, 1
          %s2024 = smul.addr %s2023, 16
          %s2025 = scalar_lea.vmem [#allocation13], %s2024
          %2026 = dma.done %s2022, 256
        $region96: #{tpu_custom_call.1} parent=91 // pred_fallthru
          _
      $region92: #{tpu_custom_call.1} parent=5 // pred_fallthru
        _
    $region6: #{tpu_custom_call.1} parent=1 // loop_footer
      %s31 = sadd.s32 1, %s27
    $region7: #{tpu_custom_call.1} parent=1 // loop_footer_branch
      %26 = sbr.rel target = $region3
    $region8: #{tpu_custom_call.1} parent=1 // loop_exit
      _
    %2027 = vsyncpa [#allocation3], 1
    %s2028 = scalar_lea.sflag [#allocation3], 1
    %2029 = vsyncpa %s2028, 1
    %2030 = vsyncpa [#allocation6], 1
    %s2031 = scalar_lea.sflag [#allocation6], 1
    %2032 = vsyncpa %s2031, 1
    %2033 = vsyncpa [#allocation9], 1
    %2034 = vsyncpa [#allocation12], 1
    %2035 = vsyncpa [#allocation4], 1
    %s2036 = scalar_lea.sflag [#allocation4], 1
    %2037 = vsyncpa %s2036, 1

</llo_original>
